<compile_context>
chip_gen: v5e
topology: v5e:2x2
jax: 0.10.0
libtpu: 0.0.40
codegen_flags: <defaults>
</compile_context>

<pallas_src>
import functools

import jax
import jax.numpy as jnp
from jax import lax
from jax.experimental import pallas as pl

# ----------------------------- mini-BERT config -----------------------------
VOCAB = 64
MAX_POS = 16
TYPE_VOCAB = 2
HIDDEN = 32
NUM_HEADS = 2
HEAD_DIM = HIDDEN // NUM_HEADS
INTERMEDIATE = 64
NUM_LAYERS = 2
LN_EPS = 1e-12

VEC_W = 3 * HIDDEN  # padded row width of the packed bias/LayerNorm buffer (= 96)

# row indices into the packed "vecs" buffer
_V_EMB_LN_G, _V_EMB_LN_B, _V_TYPE0, _V_TYPE1, _V_POOL_B = 0, 1, 2, 3, 4
_V_LAYER_BASE = 5
_V_PER_LAYER = 8  # bqkv, bo, ln1_g, ln1_b, b1, b2, ln2_g, ln2_b


# ------------------------------ shared math ------------------------------
def _layer_norm(x, g, b):
    mu = jnp.mean(x, axis=-1, keepdims=True)
    xc = x - mu
    var = jnp.mean(xc * xc, axis=-1, keepdims=True)
    inv = lax.rsqrt(var + LN_EPS)
    return xc * inv * g + b


def _gelu_tanh(x):
    # tanh-approx GELU.
    # TODO(synk): HF BERT's default is exact erf GELU; tanh approximation differs by ~1e-3.
    c = 0.7978845608028654  # sqrt(2/pi)
    return 0.5 * x * (1.0 + jnp.tanh(c * (x + 0.044715 * x * x * x)))


# ------------------------------ fused Pallas kernel ------------------------------
def _bert_fused_kernel(ids_ref, tt_ref, mask_ref, emb_ref, vecs_ref,
                       wqkv_ref, wow1_ref, w2_ref, out_ref, *, B, S):
    D, H, Dh, I, V = HIDDEN, NUM_HEADS, HEAD_DIM, INTERMEDIATE, VOCAB
    N = B * S
    f32 = jnp.float32

    # ---------------- embeddings (fused; no XLA gathers) ----------------
    word_tab = emb_ref[0:V, :]                                            # (64, D)
    one_hot = (ids_ref[...] == lax.broadcasted_iota(jnp.int32, (N, V), 1)).astype(f32)
    emb = jnp.dot(one_hot, word_tab, preferred_element_type=f32)          # (N, D)

    pos = emb_ref[V:V + S, :]                                             # (S, D), 8-aligned slice
    emb = emb + jnp.concatenate([pos] * B, axis=0)                        # tile over batch

    type0 = vecs_ref[_V_TYPE0][:, 0:D]                                    # (1, D)
    type1 = vecs_ref[_V_TYPE1][:, 0:D]
    tt_f = tt_ref[...].astype(f32)                                        # (N, 1), values in {0,1}
    emb = emb + type0 + tt_f * (type1 - type0)                            # == take(type_emb, tt)

    # Embedding LayerNorm (no residual).
    h = _layer_norm(emb, vecs_ref[_V_EMB_LN_G][:, 0:D], vecs_ref[_V_EMB_LN_B][:, 0:D])

    # ---------------- additive attention-mask bias (hoisted, built once) ----------------
    maskf = mask_ref[...].astype(f32)                                     # (B, S)
    bias2 = (1.0 - maskf) * -10000.0
    bias_hb = jnp.concatenate([bias2] * H, axis=0)[:, None, :]            # (H*B, 1, S)

    for li in range(NUM_LAYERS):
        vb = _V_LAYER_BASE + li * _V_PER_LAYER

        # fused QKV projection; 1/sqrt(Dh) folded into Q weights/bias at pack time.
        qkv = jnp.dot(h, wqkv_ref[li], preferred_element_type=f32) + vecs_ref[vb + 0]   # (N, 3D)

        # batch both heads along a leading (H*B) dim -> one score / softmax / context each
        qb = jnp.concatenate(
            [qkv[:, hh * Dh:(hh + 1) * Dh].reshape(B, S, Dh) for hh in range(H)], axis=0)
        kb = jnp.concatenate(
            [qkv[:, D + hh * Dh:D + (hh + 1) * Dh].reshape(B, S, Dh) for hh in range(H)], axis=0)
        vbv = jnp.concatenate(
            [qkv[:, 2 * D + hh * Dh:2 * D + (hh + 1) * Dh].reshape(B, S, Dh) for hh in range(H)],
            axis=0)

        s = jnp.einsum("bqd,bkd->bqk", qb, kb, preferred_element_type=f32)   # (H*B, S, S)
        s = s + bias_hb
        s = s - jnp.max(s, axis=-1, keepdims=True)
        p = jnp.exp(s)
        p = p * pl.reciprocal(jnp.sum(p, axis=-1, keepdims=True), approx=True)
        ctx = jnp.einsum("bqk,bkd->bqd", p, vbv, preferred_element_type=f32)  # (H*B, S, Dh)

        # merge heads back into (N, D) and do ONE output-projection matmul
        ctx_full = jnp.concatenate(
            [ctx[hh * B:(hh + 1) * B].reshape(N, Dh) for hh in range(H)], axis=-1)       # (N, D)

        wow1 = wow1_ref[li]                                                # (D, D + I)
        attn_out = (jnp.dot(ctx_full, wow1[:, 0:D], preferred_element_type=f32)
                    + vecs_ref[vb + 1][:, 0:D])

        h1 = _layer_norm(attn_out + h, vecs_ref[vb + 2][:, 0:D], vecs_ref[vb + 3][:, 0:D])

        # ---- feed-forward + second LayerNorm (all rows; no CLS compaction) ----
        ff = _gelu_tanh(jnp.dot(h1, wow1[:, D:D + I], preferred_element_type=f32)
                        + vecs_ref[vb + 4][:, 0:I])
        ff2 = jnp.dot(ff, w2_ref[li], preferred_element_type=f32) + vecs_ref[vb + 5][:, 0:D]
        h = _layer_norm(ff2 + h1, vecs_ref[vb + 6][:, 0:D], vecs_ref[vb + 7][:, 0:D])

    # ---------------- pooler: tanh(dense(CLS)) ----------------
    pooler_w = emb_ref[V + MAX_POS:V + MAX_POS + D, :]                     # (D, D), 8-aligned slice
    pooler_b = vecs_ref[_V_POOL_B][:, 0:D]
    cls = jnp.concatenate([h[b * S:b * S + 1, :] for b in range(B)], axis=0)   # (B, D)
    pooled = jnp.tanh(jnp.dot(cls, pooler_w, preferred_element_type=f32) + pooler_b)
    out_ref[...] = pooled.astype(out_ref.dtype)


# ------------------------------ parameter init -------------------------------
def init_params(key):
    def nrm(key, shape):
        return 0.02 * jax.random.normal(key, shape, dtype=jnp.float32)

    keys = jax.random.split(key, 4 + NUM_LAYERS)
    params = {
        "word_emb": nrm(keys[0], (VOCAB, HIDDEN)),
        "pos_emb": nrm(keys[1], (MAX_POS, HIDDEN)),
        "type_emb": nrm(keys[2], (TYPE_VOCAB, HIDDEN)),
        "emb_ln_g": jnp.ones((HIDDEN,), jnp.float32),
        "emb_ln_b": jnp.zeros((HIDDEN,), jnp.float32),
        "layers": [],
    }
    for li in range(NUM_LAYERS):
        lk = jax.random.split(keys[4 + li], 6)
        params["layers"].append({
            "wq": nrm(lk[0], (HIDDEN, HIDDEN)), "bq": jnp.zeros((HIDDEN,), jnp.float32),
            "wk": nrm(lk[1], (HIDDEN, HIDDEN)), "bk": jnp.zeros((HIDDEN,), jnp.float32),
            "wv": nrm(lk[2], (HIDDEN, HIDDEN)), "bv": jnp.zeros((HIDDEN,), jnp.float32),
            "wo": nrm(lk[3], (HIDDEN, HIDDEN)), "bo": jnp.zeros((HIDDEN,), jnp.float32),
            "ln1_g": jnp.ones((HIDDEN,), jnp.float32), "ln1_b": jnp.zeros((HIDDEN,), jnp.float32),
            "w1": nrm(lk[4], (HIDDEN, INTERMEDIATE)), "b1": jnp.zeros((INTERMEDIATE,), jnp.float32),
            "w2": nrm(lk[5], (INTERMEDIATE, HIDDEN)), "b2": jnp.zeros((HIDDEN,), jnp.float32),
            "ln2_g": jnp.ones((HIDDEN,), jnp.float32), "ln2_b": jnp.zeros((HIDDEN,), jnp.float32),
        })
    pk = jax.random.split(keys[3], 1)[0]
    params["pooler_w"] = nrm(pk, (HIDDEN, HIDDEN))
    params["pooler_b"] = jnp.zeros((HIDDEN,), jnp.float32)
    return params


def pack_params(params):
    """Pack all weights into 5 contiguous buffers (one DMA each), fuse QKV,
    fold 1/sqrt(Dh) into the Q weights/bias. Done once, outside jit."""
    scale = 1.0 / float(HEAD_DIM) ** 0.5

    def stack(name):
        return jnp.stack([lp[name] for lp in params["layers"]], axis=0)

    wqkv = jnp.concatenate([stack("wq") * scale, stack("wk"), stack("wv")], axis=-1)  # (L, D, 3D)
    wow1 = jnp.concatenate([stack("wo"), stack("w1")], axis=-1)                       # (L, D, D+I)
    w2 = stack("w2")                                                                  # (L, I, D)

    # embedding tables + pooler weight stacked along rows (all segment starts 8-aligned)
    emb_pack = jnp.concatenate(
        [params["word_emb"], params["pos_emb"], params["pooler_w"]], axis=0)          # (112, D)

    def row(v):
        v = jnp.asarray(v, jnp.float32).reshape(1, -1)
        return jnp.pad(v, ((0, 0), (0, VEC_W - v.shape[1])))

    rows = [row(params["emb_ln_g"]), row(params["emb_ln_b"]),
            row(params["type_emb"][0]), row(params["type_emb"][1]),
            row(params["pooler_b"])]
    for lp in params["layers"]:
        bqkv = jnp.concatenate([lp["bq"] * scale, lp["bk"], lp["bv"]])
        rows += [row(bqkv), row(lp["bo"]), row(lp["ln1_g"]), row(lp["ln1_b"]),
                 row(lp["b1"]), row(lp["b2"]), row(lp["ln2_g"]), row(lp["ln2_b"])]
    vecs = jnp.stack(rows, axis=0)                                                    # (21, 1, 3D)

    return {"emb_pack": emb_pack, "vecs": vecs, "wqkv": wqkv, "wow1": wow1, "w2": w2}


# -------------------------------- forward pass --------------------------------
def model_base_forward(packed, input_ids, attention_mask, token_type_ids):
    """Returns BERT pooler_output, shape (B, HIDDEN). One fused gridless Pallas kernel."""
    B, S = input_ids.shape
    # Row-major reshapes of tiny int32 arrays only (metadata-level in XLA); all embedding
    # lookups and all compute happen inside the single Pallas kernel.
    ids = input_ids.astype(jnp.int32).reshape(B * S, 1)
    tt = token_type_ids.astype(jnp.int32).reshape(B * S, 1)
    mask = attention_mask.astype(jnp.int32)

    return pl.pallas_call(
        functools.partial(_bert_fused_kernel, B=B, S=S),
        out_shape=jax.ShapeDtypeStruct((B, HIDDEN), jnp.float32),
    )(ids, tt, mask, packed["emb_pack"], packed["vecs"],
      packed["wqkv"], packed["wow1"], packed["w2"])


# ------------------------------ pure-JAX reference ------------------------------
def reference_forward(params, input_ids, attention_mask, token_type_ids):
    B, S = input_ids.shape
    D, H, Dh = HIDDEN, NUM_HEADS, HEAD_DIM
    pos_ids = jnp.arange(S, dtype=jnp.int32)
    emb = (jnp.take(params["word_emb"], input_ids, axis=0)
           + jnp.take(params["pos_emb"], pos_ids, axis=0)[None, :, :]
           + jnp.take(params["type_emb"], token_type_ids, axis=0))
    h = _layer_norm(emb, params["emb_ln_g"], params["emb_ln_b"])
    bias = (1.0 - attention_mask.astype(jnp.float32))[:, None, None, :] * -10000.0
    scale = 1.0 / float(Dh) ** 0.5
    for lp in params["layers"]:
        q = (h @ lp["wq"] + lp["bq"]).reshape(B, S, H, Dh).transpose(0, 2, 1, 3)
        k = (h @ lp["wk"] + lp["bk"]).reshape(B, S, H, Dh).transpose(0, 2, 1, 3)
        v = (h @ lp["wv"] + lp["bv"]).reshape(B, S, H, Dh).transpose(0, 2, 1, 3)
        s = jnp.einsum("bhqd,bhkd->bhqk", q, k) * scale + bias
        p = jax.nn.softmax(s, axis=-1)
        ctx = jnp.einsum("bhqk,bhkd->bhqd", p, v).transpose(0, 2, 1, 3).reshape(B, S, D)
        h1 = _layer_norm(ctx @ lp["wo"] + lp["bo"] + h, lp["ln1_g"], lp["ln1_b"])
        ff = _gelu_tanh(h1 @ lp["w1"] + lp["b1"])
        h = _layer_norm(ff @ lp["w2"] + lp["b2"] + h1, lp["ln2_g"], lp["ln2_b"])
    cls = h[:, 0, :]
    return jnp.tanh(cls @ params["pooler_w"] + params["pooler_b"])


# ------------------------------------ main ------------------------------------
if __name__ == "__main__":
    key = jax.random.PRNGKey(0)
    pkey, ikey = jax.random.split(key)

    params = init_params(pkey)
    packed = pack_params(params)

    B, S = 2, 8
    input_ids = jax.random.randint(ikey, (B, S), 0, VOCAB, dtype=jnp.int32)
    # second sequence has 2 padding tokens at the end
    attention_mask = jnp.array(
        [[1, 1, 1, 1, 1, 1, 1, 1],
         [1, 1, 1, 1, 1, 1, 0, 0]], dtype=jnp.int32)
    token_type_ids = jnp.array(
        [[0, 0, 0, 0, 1, 1, 1, 1],
         [0, 0, 0, 0, 0, 1, 1, 1]], dtype=jnp.int32)

    pooled = jax.jit(model_base_forward)(packed, input_ids, attention_mask, token_type_ids)
    pooled = jax.block_until_ready(pooled)

    assert pooled.shape == (B, HIDDEN)
    assert pooled.dtype == jnp.float32
    assert bool(jnp.all(jnp.isfinite(pooled)))

    # Correctness check vs. pure-JAX reference (loose tol: approx reciprocal in softmax).
    ref = reference_forward(params, input_ids, attention_mask, token_type_ids)
    assert bool(jnp.allclose(pooled, ref, atol=2e-2, rtol=2e-2))

    print("KERNEL_OK")
</pallas_src>

<mosaic_0001>
module attributes {stable_mosaic.version = 11 : i64} {
  func.func @_bert_fused_kernel(%arg0: memref<16x1xi32, #tpu.memory_space<vmem>>, %arg1: memref<16x1xi32, #tpu.memory_space<vmem>>, %arg2: memref<2x8xi32, #tpu.memory_space<vmem>>, %arg3: memref<112x32xf32, #tpu.memory_space<vmem>>, %arg4: memref<21x1x96xf32, #tpu.memory_space<vmem>>, %arg5: memref<2x32x96xf32, #tpu.memory_space<vmem>>, %arg6: memref<2x32x96xf32, #tpu.memory_space<vmem>>, %arg7: memref<2x64x32xf32, #tpu.memory_space<vmem>>, %arg8: memref<2x32xf32, #tpu.memory_space<vmem>>) attributes {dimension_semantics = [], scalar_prefetch = 0 : i64, scratch_operands = 0 : i64, tpu.core_type = #tpu.core_type<tc>} {
    %c0 = arith.constant 0 : index
    %c0_0 = arith.constant 0 : index
    %0 = vector.load %arg3[%c0, %c0_0] : memref<112x32xf32, #tpu.memory_space<vmem>>, vector<64x32xf32>
    %c0_1 = arith.constant 0 : index
    %c0_2 = arith.constant 0 : index
    %1 = vector.load %arg0[%c0_1, %c0_2] : memref<16x1xi32, #tpu.memory_space<vmem>>, vector<16x1xi32>
    %2 = tpu.iota {dimensions = array<i32: 1>} : vector<16x64xi32>
    %3 = vector.broadcast %1 : vector<16x1xi32> to vector<16x64xi32>
    %4 = arith.cmpi eq, %3, %2 : vector<16x64xi32>
    %5 = arith.extui %4 : vector<16x64xi1> to vector<16x64xi32>
    %6 = arith.sitofp %5 : vector<16x64xi32> to vector<16x64xf32>
    %cst = arith.constant dense<0.000000e+00> : vector<16x32xf32>
    %7 = tpu.matmul %6, %0, %cst {dimension_numbers = #tpu.dot_dimension_numbers<[1], [0], [0], [1], [0, 0, 1, 1], [], []>} : vector<16x64xf32>, vector<64x32xf32>, vector<16x32xf32> -> vector<16x32xf32>
    %c64 = arith.constant 64 : index
    %c0_3 = arith.constant 0 : index
    %8 = vector.load %arg3[%c64, %c0_3] : memref<112x32xf32, #tpu.memory_space<vmem>>, vector<8x32xf32>
    %9 = tpu.concatenate %8, %8 in 0 : vector<8x32xf32>, vector<8x32xf32> -> vector<16x32xf32>
    %10 = arith.addf %7, %9 : vector<16x32xf32>
    %c2 = arith.constant 2 : index
    %c0_4 = arith.constant 0 : index
    %c0_5 = arith.constant 0 : index
    %11 = vector.load %arg4[%c2, %c0_4, %c0_5] : memref<21x1x96xf32, #tpu.memory_space<vmem>>, vector<1x1x96xf32>
    %12 = vector.shape_cast %11 : vector<1x1x96xf32> to vector<1x96xf32>
    %13 = vector.extract_strided_slice %12 {offsets = [0, 0], sizes = [1, 32], strides = [1, 1]} : vector<1x96xf32> to vector<1x32xf32>
    %c3 = arith.constant 3 : index
    %c0_6 = arith.constant 0 : index
    %c0_7 = arith.constant 0 : index
    %14 = vector.load %arg4[%c3, %c0_6, %c0_7] : memref<21x1x96xf32, #tpu.memory_space<vmem>>, vector<1x1x96xf32>
    %15 = vector.shape_cast %14 : vector<1x1x96xf32> to vector<1x96xf32>
    %16 = vector.extract_strided_slice %15 {offsets = [0, 0], sizes = [1, 32], strides = [1, 1]} : vector<1x96xf32> to vector<1x32xf32>
    %c0_8 = arith.constant 0 : index
    %c0_9 = arith.constant 0 : index
    %17 = vector.load %arg1[%c0_8, %c0_9] : memref<16x1xi32, #tpu.memory_space<vmem>>, vector<16x1xi32>
    %18 = arith.sitofp %17 : vector<16x1xi32> to vector<16x1xf32>
    %19 = vector.broadcast %13 : vector<1x32xf32> to vector<16x32xf32>
    %20 = arith.addf %10, %19 : vector<16x32xf32>
    %21 = arith.subf %16, %13 : vector<1x32xf32>
    %22 = vector.broadcast %18 : vector<16x1xf32> to vector<16x32xf32>
    %23 = vector.broadcast %21 : vector<1x32xf32> to vector<16x32xf32>
    %24 = arith.mulf %22, %23 : vector<16x32xf32>
    %25 = arith.addf %20, %24 : vector<16x32xf32>
    %c0_10 = arith.constant 0 : index
    %c0_11 = arith.constant 0 : index
    %c0_12 = arith.constant 0 : index
    %26 = vector.load %arg4[%c0_10, %c0_11, %c0_12] : memref<21x1x96xf32, #tpu.memory_space<vmem>>, vector<1x1x96xf32>
    %27 = vector.shape_cast %26 : vector<1x1x96xf32> to vector<1x96xf32>
    %28 = vector.extract_strided_slice %27 {offsets = [0, 0], sizes = [1, 32], strides = [1, 1]} : vector<1x96xf32> to vector<1x32xf32>
    %c1 = arith.constant 1 : index
    %c0_13 = arith.constant 0 : index
    %c0_14 = arith.constant 0 : index
    %29 = vector.load %arg4[%c1, %c0_13, %c0_14] : memref<21x1x96xf32, #tpu.memory_space<vmem>>, vector<1x1x96xf32>
    %30 = vector.shape_cast %29 : vector<1x1x96xf32> to vector<1x96xf32>
    %31 = vector.extract_strided_slice %30 {offsets = [0, 0], sizes = [1, 32], strides = [1, 1]} : vector<1x96xf32> to vector<1x32xf32>
    %cst_15 = arith.constant dense<0.000000e+00> : vector<16xf32>
    %32 = vector.multi_reduction <add>, %25, %cst_15 [1] : vector<16x32xf32> to vector<16xf32>
    %33 = vector.shape_cast %32 : vector<16xf32> to vector<16x1xf32>
    %cst_16 = arith.constant 3.200000e+01 : f32
    %34 = vector.broadcast %cst_16 : f32 to vector<16x1xf32>
    %35 = arith.divf %33, %34 : vector<16x1xf32>
    %36 = vector.broadcast %35 : vector<16x1xf32> to vector<16x32xf32>
    %37 = arith.subf %25, %36 : vector<16x32xf32>
    %38 = arith.mulf %37, %37 : vector<16x32xf32>
    %cst_17 = arith.constant dense<0.000000e+00> : vector<16xf32>
    %39 = vector.multi_reduction <add>, %38, %cst_17 [1] : vector<16x32xf32> to vector<16xf32>
    %40 = vector.shape_cast %39 : vector<16xf32> to vector<16x1xf32>
    %cst_18 = arith.constant 3.200000e+01 : f32
    %41 = vector.broadcast %cst_18 : f32 to vector<16x1xf32>
    %42 = arith.divf %40, %41 : vector<16x1xf32>
    %cst_19 = arith.constant 9.99999996E-13 : f32
    %43 = vector.broadcast %cst_19 : f32 to vector<16x1xf32>
    %44 = arith.addf %42, %43 : vector<16x1xf32>
    %45 = math.rsqrt %44 : vector<16x1xf32>
    %46 = vector.broadcast %45 : vector<16x1xf32> to vector<16x32xf32>
    %47 = arith.mulf %37, %46 : vector<16x32xf32>
    %48 = vector.broadcast %28 : vector<1x32xf32> to vector<16x32xf32>
    %49 = arith.mulf %47, %48 : vector<16x32xf32>
    %50 = vector.broadcast %31 : vector<1x32xf32> to vector<16x32xf32>
    %51 = arith.addf %49, %50 : vector<16x32xf32>
    %c0_20 = arith.constant 0 : index
    %c0_21 = arith.constant 0 : index
    %52 = vector.load %arg2[%c0_20, %c0_21] : memref<2x8xi32, #tpu.memory_space<vmem>>, vector<2x8xi32>
    %53 = arith.sitofp %52 : vector<2x8xi32> to vector<2x8xf32>
    %cst_22 = arith.constant 1.000000e+00 : f32
    %54 = vector.broadcast %cst_22 : f32 to vector<2x8xf32>
    %55 = arith.subf %54, %53 : vector<2x8xf32>
    %cst_23 = arith.constant -1.000000e+04 : f32
    %56 = vector.broadcast %cst_23 : f32 to vector<2x8xf32>
    %57 = arith.mulf %55, %56 : vector<2x8xf32>
    %58 = tpu.concatenate %57, %57 in 0 : vector<2x8xf32>, vector<2x8xf32> -> vector<4x8xf32>
    %59 = vector.shape_cast %58 : vector<4x8xf32> to vector<4x1x8xf32>
    %c0_24 = arith.constant 0 : index
    %c0_25 = arith.constant 0 : index
    %c0_26 = arith.constant 0 : index
    %60 = vector.load %arg5[%c0_24, %c0_25, %c0_26] : memref<2x32x96xf32, #tpu.memory_space<vmem>>, vector<1x32x96xf32>
    %61 = vector.shape_cast %60 : vector<1x32x96xf32> to vector<32x96xf32>
    %cst_27 = arith.constant dense<0.000000e+00> : vector<16x96xf32>
    %62 = tpu.matmul %51, %61, %cst_27 {dimension_numbers = #tpu.dot_dimension_numbers<[1], [0], [0], [1], [0, 0, 1, 1], [], []>} : vector<16x32xf32>, vector<32x96xf32>, vector<16x96xf32> -> vector<16x96xf32>
    %c5 = arith.constant 5 : index
    %c0_28 = arith.constant 0 : index
    %c0_29 = arith.constant 0 : index
    %63 = vector.load %arg4[%c5, %c0_28, %c0_29] : memref<21x1x96xf32, #tpu.memory_space<vmem>>, vector<1x1x96xf32>
    %64 = vector.shape_cast %63 : vector<1x1x96xf32> to vector<1x96xf32>
    %65 = vector.broadcast %64 : vector<1x96xf32> to vector<16x96xf32>
    %66 = arith.addf %62, %65 : vector<16x96xf32>
    %67 = vector.extract_strided_slice %66 {offsets = [0, 0], sizes = [16, 16], strides = [1, 1]} : vector<16x96xf32> to vector<16x16xf32>
    %68 = vector.shape_cast %67 : vector<16x16xf32> to vector<2x8x16xf32>
    %69 = vector.extract_strided_slice %66 {offsets = [0, 16], sizes = [16, 16], strides = [1, 1]} : vector<16x96xf32> to vector<16x16xf32>
    %70 = vector.shape_cast %69 : vector<16x16xf32> to vector<2x8x16xf32>
    %71 = tpu.concatenate %68, %70 in 0 : vector<2x8x16xf32>, vector<2x8x16xf32> -> vector<4x8x16xf32>
    %72 = vector.extract_strided_slice %66 {offsets = [0, 32], sizes = [16, 16], strides = [1, 1]} : vector<16x96xf32> to vector<16x16xf32>
    %73 = vector.shape_cast %72 : vector<16x16xf32> to vector<2x8x16xf32>
    %74 = vector.extract_strided_slice %66 {offsets = [0, 48], sizes = [16, 16], strides = [1, 1]} : vector<16x96xf32> to vector<16x16xf32>
    %75 = vector.shape_cast %74 : vector<16x16xf32> to vector<2x8x16xf32>
    %76 = tpu.concatenate %73, %75 in 0 : vector<2x8x16xf32>, vector<2x8x16xf32> -> vector<4x8x16xf32>
    %77 = vector.extract_strided_slice %66 {offsets = [0, 64], sizes = [16, 16], strides = [1, 1]} : vector<16x96xf32> to vector<16x16xf32>
    %78 = vector.shape_cast %77 : vector<16x16xf32> to vector<2x8x16xf32>
    %79 = vector.extract_strided_slice %66 {offsets = [0, 80], sizes = [16, 16], strides = [1, 1]} : vector<16x96xf32> to vector<16x16xf32>
    %80 = vector.shape_cast %79 : vector<16x16xf32> to vector<2x8x16xf32>
    %81 = tpu.concatenate %78, %80 in 0 : vector<2x8x16xf32>, vector<2x8x16xf32> -> vector<4x8x16xf32>
    "tpu.trace_start"() <{level = 10 : i32, message = "bqd,bkd->bqk"}> : () -> ()
    %cst_30 = arith.constant dense<0.000000e+00> : vector<4x8x8xf32>
    %82 = tpu.matmul %71, %76, %cst_30 {dimension_numbers = #tpu.dot_dimension_numbers<[2], [2], [1], [1], [0, 0, 0, 1, 1, 1], [0], [0]>} : vector<4x8x16xf32>, vector<4x8x16xf32>, vector<4x8x8xf32> -> vector<4x8x8xf32>
    "tpu.trace_stop"() : () -> ()
    %83 = vector.broadcast %59 : vector<4x1x8xf32> to vector<4x8x8xf32>
    %84 = arith.addf %82, %83 : vector<4x8x8xf32>
    %cst_31 = arith.constant dense<0xFF800000> : vector<4x8xf32>
    %85 = vector.multi_reduction <maximumf>, %84, %cst_31 [2] : vector<4x8x8xf32> to vector<4x8xf32>
    %86 = vector.shape_cast %85 : vector<4x8xf32> to vector<4x8x1xf32>
    %87 = vector.broadcast %86 : vector<4x8x1xf32> to vector<4x8x8xf32>
    %88 = arith.subf %84, %87 : vector<4x8x8xf32>
    %89 = math.exp %88 : vector<4x8x8xf32>
    %cst_32 = arith.constant dense<0.000000e+00> : vector<4x8xf32>
    %90 = vector.multi_reduction <add>, %89, %cst_32 [2] : vector<4x8x8xf32> to vector<4x8xf32>
    %91 = vector.shape_cast %90 : vector<4x8xf32> to vector<4x8x1xf32>
    %92 = tpu.reciprocal %91 {approx = true} : vector<4x8x1xf32> -> vector<4x8x1xf32>
    %93 = vector.broadcast %92 : vector<4x8x1xf32> to vector<4x8x8xf32>
    %94 = arith.mulf %89, %93 : vector<4x8x8xf32>
    "tpu.trace_start"() <{level = 10 : i32, message = "bqk,bkd->bqd"}> : () -> ()
    %cst_33 = arith.constant dense<0.000000e+00> : vector<4x8x16xf32>
    %95 = tpu.matmul %94, %81, %cst_33 {dimension_numbers = #tpu.dot_dimension_numbers<[2], [1], [1], [2], [0, 0, 0, 1, 1, 2], [0], [0]>} : vector<4x8x8xf32>, vector<4x8x16xf32>, vector<4x8x16xf32> -> vector<4x8x16xf32>
    "tpu.trace_stop"() : () -> ()
    %96 = vector.extract_strided_slice %95 {offsets = [0, 0, 0], sizes = [2, 8, 16], strides = [1, 1, 1]} : vector<4x8x16xf32> to vector<2x8x16xf32>
    %97 = vector.shape_cast %96 : vector<2x8x16xf32> to vector<16x16xf32>
    %98 = vector.extract_strided_slice %95 {offsets = [2, 0, 0], sizes = [2, 8, 16], strides = [1, 1, 1]} : vector<4x8x16xf32> to vector<2x8x16xf32>
    %99 = vector.shape_cast %98 : vector<2x8x16xf32> to vector<16x16xf32>
    %100 = tpu.concatenate %97, %99 in 1 : vector<16x16xf32>, vector<16x16xf32> -> vector<16x32xf32>
    %c0_34 = arith.constant 0 : index
    %c0_35 = arith.constant 0 : index
    %c0_36 = arith.constant 0 : index
    %101 = vector.load %arg6[%c0_34, %c0_35, %c0_36] : memref<2x32x96xf32, #tpu.memory_space<vmem>>, vector<1x32x96xf32>
    %102 = vector.shape_cast %101 : vector<1x32x96xf32> to vector<32x96xf32>
    %103 = vector.extract_strided_slice %102 {offsets = [0, 0], sizes = [32, 32], strides = [1, 1]} : vector<32x96xf32> to vector<32x32xf32>
    %cst_37 = arith.constant dense<0.000000e+00> : vector<16x32xf32>
    %104 = tpu.matmul %100, %103, %cst_37 {dimension_numbers = #tpu.dot_dimension_numbers<[1], [0], [0], [1], [0, 0, 1, 1], [], []>} : vector<16x32xf32>, vector<32x32xf32>, vector<16x32xf32> -> vector<16x32xf32>
    %c6 = arith.constant 6 : index
    %c0_38 = arith.constant 0 : index
    %c0_39 = arith.constant 0 : index
    %105 = vector.load %arg4[%c6, %c0_38, %c0_39] : memref<21x1x96xf32, #tpu.memory_space<vmem>>, vector<1x1x96xf32>
    %106 = vector.shape_cast %105 : vector<1x1x96xf32> to vector<1x96xf32>
    %107 = vector.extract_strided_slice %106 {offsets = [0, 0], sizes = [1, 32], strides = [1, 1]} : vector<1x96xf32> to vector<1x32xf32>
    %108 = vector.broadcast %107 : vector<1x32xf32> to vector<16x32xf32>
    %109 = arith.addf %104, %108 : vector<16x32xf32>
    %110 = arith.addf %109, %51 : vector<16x32xf32>
    %c7 = arith.constant 7 : index
    %c0_40 = arith.constant 0 : index
    %c0_41 = arith.constant 0 : index
    %111 = vector.load %arg4[%c7, %c0_40, %c0_41] : memref<21x1x96xf32, #tpu.memory_space<vmem>>, vector<1x1x96xf32>
    %112 = vector.shape_cast %111 : vector<1x1x96xf32> to vector<1x96xf32>
    %113 = vector.extract_strided_slice %112 {offsets = [0, 0], sizes = [1, 32], strides = [1, 1]} : vector<1x96xf32> to vector<1x32xf32>
    %c8 = arith.constant 8 : index
    %c0_42 = arith.constant 0 : index
    %c0_43 = arith.constant 0 : index
    %114 = vector.load %arg4[%c8, %c0_42, %c0_43] : memref<21x1x96xf32, #tpu.memory_space<vmem>>, vector<1x1x96xf32>
    %115 = vector.shape_cast %114 : vector<1x1x96xf32> to vector<1x96xf32>
    %116 = vector.extract_strided_slice %115 {offsets = [0, 0], sizes = [1, 32], strides = [1, 1]} : vector<1x96xf32> to vector<1x32xf32>
    %cst_44 = arith.constant dense<0.000000e+00> : vector<16xf32>
    %117 = vector.multi_reduction <add>, %110, %cst_44 [1] : vector<16x32xf32> to vector<16xf32>
    %118 = vector.shape_cast %117 : vector<16xf32> to vector<16x1xf32>
    %cst_45 = arith.constant 3.200000e+01 : f32
    %119 = vector.broadcast %cst_45 : f32 to vector<16x1xf32>
    %120 = arith.divf %118, %119 : vector<16x1xf32>
    %121 = vector.broadcast %120 : vector<16x1xf32> to vector<16x32xf32>
    %122 = arith.subf %110, %121 : vector<16x32xf32>
    %123 = arith.mulf %122, %122 : vector<16x32xf32>
    %cst_46 = arith.constant dense<0.000000e+00> : vector<16xf32>
    %124 = vector.multi_reduction <add>, %123, %cst_46 [1] : vector<16x32xf32> to vector<16xf32>
    %125 = vector.shape_cast %124 : vector<16xf32> to vector<16x1xf32>
    %cst_47 = arith.constant 3.200000e+01 : f32
    %126 = vector.broadcast %cst_47 : f32 to vector<16x1xf32>
    %127 = arith.divf %125, %126 : vector<16x1xf32>
    %cst_48 = arith.constant 9.99999996E-13 : f32
    %128 = vector.broadcast %cst_48 : f32 to vector<16x1xf32>
    %129 = arith.addf %127, %128 : vector<16x1xf32>
    %130 = math.rsqrt %129 : vector<16x1xf32>
    %131 = vector.broadcast %130 : vector<16x1xf32> to vector<16x32xf32>
    %132 = arith.mulf %122, %131 : vector<16x32xf32>
    %133 = vector.broadcast %113 : vector<1x32xf32> to vector<16x32xf32>
    %134 = arith.mulf %132, %133 : vector<16x32xf32>
    %135 = vector.broadcast %116 : vector<1x32xf32> to vector<16x32xf32>
    %136 = arith.addf %134, %135 : vector<16x32xf32>
    %137 = vector.extract_strided_slice %102 {offsets = [0, 32], sizes = [32, 64], strides = [1, 1]} : vector<32x96xf32> to vector<32x64xf32>
    %cst_49 = arith.constant dense<0.000000e+00> : vector<16x64xf32>
    %138 = tpu.matmul %136, %137, %cst_49 {dimension_numbers = #tpu.dot_dimension_numbers<[1], [0], [0], [1], [0, 0, 1, 1], [], []>} : vector<16x32xf32>, vector<32x64xf32>, vector<16x64xf32> -> vector<16x64xf32>
    %c9 = arith.constant 9 : index
    %c0_50 = arith.constant 0 : index
    %c0_51 = arith.constant 0 : index
    %139 = vector.load %arg4[%c9, %c0_50, %c0_51] : memref<21x1x96xf32, #tpu.memory_space<vmem>>, vector<1x1x96xf32>
    %140 = vector.shape_cast %139 : vector<1x1x96xf32> to vector<1x96xf32>
    %141 = vector.extract_strided_slice %140 {offsets = [0, 0], sizes = [1, 64], strides = [1, 1]} : vector<1x96xf32> to vector<1x64xf32>
    %142 = vector.broadcast %141 : vector<1x64xf32> to vector<16x64xf32>
    %143 = arith.addf %138, %142 : vector<16x64xf32>
    %cst_52 = arith.constant 5.000000e-01 : f32
    %144 = vector.broadcast %cst_52 : f32 to vector<16x64xf32>
    %145 = arith.mulf %144, %143 : vector<16x64xf32>
    %cst_53 = arith.constant 4.471500e-02 : f32
    %146 = vector.broadcast %cst_53 : f32 to vector<16x64xf32>
    %147 = arith.mulf %146, %143 : vector<16x64xf32>
    %148 = arith.mulf %147, %143 : vector<16x64xf32>
    %149 = arith.mulf %148, %143 : vector<16x64xf32>
    %150 = arith.addf %143, %149 : vector<16x64xf32>
    %cst_54 = arith.constant 0.797884583 : f32
    %151 = vector.broadcast %cst_54 : f32 to vector<16x64xf32>
    %152 = arith.mulf %151, %150 : vector<16x64xf32>
    %153 = math.tanh %152 : vector<16x64xf32>
    %cst_55 = arith.constant 1.000000e+00 : f32
    %154 = vector.broadcast %cst_55 : f32 to vector<16x64xf32>
    %155 = arith.addf %154, %153 : vector<16x64xf32>
    %156 = arith.mulf %145, %155 : vector<16x64xf32>
    %c0_56 = arith.constant 0 : index
    %c0_57 = arith.constant 0 : index
    %c0_58 = arith.constant 0 : index
    %157 = vector.load %arg7[%c0_56, %c0_57, %c0_58] : memref<2x64x32xf32, #tpu.memory_space<vmem>>, vector<1x64x32xf32>
    %158 = vector.shape_cast %157 : vector<1x64x32xf32> to vector<64x32xf32>
    %cst_59 = arith.constant dense<0.000000e+00> : vector<16x32xf32>
    %159 = tpu.matmul %156, %158, %cst_59 {dimension_numbers = #tpu.dot_dimension_numbers<[1], [0], [0], [1], [0, 0, 1, 1], [], []>} : vector<16x64xf32>, vector<64x32xf32>, vector<16x32xf32> -> vector<16x32xf32>
    %c10 = arith.constant 10 : index
    %c0_60 = arith.constant 0 : index
    %c0_61 = arith.constant 0 : index
    %160 = vector.load %arg4[%c10, %c0_60, %c0_61] : memref<21x1x96xf32, #tpu.memory_space<vmem>>, vector<1x1x96xf32>
    %161 = vector.shape_cast %160 : vector<1x1x96xf32> to vector<1x96xf32>
    %162 = vector.extract_strided_slice %161 {offsets = [0, 0], sizes = [1, 32], strides = [1, 1]} : vector<1x96xf32> to vector<1x32xf32>
    %163 = vector.broadcast %162 : vector<1x32xf32> to vector<16x32xf32>
    %164 = arith.addf %159, %163 : vector<16x32xf32>
    %165 = arith.addf %164, %136 : vector<16x32xf32>
    %c11 = arith.constant 11 : index
    %c0_62 = arith.constant 0 : index
    %c0_63 = arith.constant 0 : index
    %166 = vector.load %arg4[%c11, %c0_62, %c0_63] : memref<21x1x96xf32, #tpu.memory_space<vmem>>, vector<1x1x96xf32>
    %167 = vector.shape_cast %166 : vector<1x1x96xf32> to vector<1x96xf32>
    %168 = vector.extract_strided_slice %167 {offsets = [0, 0], sizes = [1, 32], strides = [1, 1]} : vector<1x96xf32> to vector<1x32xf32>
    %c12 = arith.constant 12 : index
    %c0_64 = arith.constant 0 : index
    %c0_65 = arith.constant 0 : index
    %169 = vector.load %arg4[%c12, %c0_64, %c0_65] : memref<21x1x96xf32, #tpu.memory_space<vmem>>, vector<1x1x96xf32>
    %170 = vector.shape_cast %169 : vector<1x1x96xf32> to vector<1x96xf32>
    %171 = vector.extract_strided_slice %170 {offsets = [0, 0], sizes = [1, 32], strides = [1, 1]} : vector<1x96xf32> to vector<1x32xf32>
    %cst_66 = arith.constant dense<0.000000e+00> : vector<16xf32>
    %172 = vector.multi_reduction <add>, %165, %cst_66 [1] : vector<16x32xf32> to vector<16xf32>
    %173 = vector.shape_cast %172 : vector<16xf32> to vector<16x1xf32>
    %cst_67 = arith.constant 3.200000e+01 : f32
    %174 = vector.broadcast %cst_67 : f32 to vector<16x1xf32>
    %175 = arith.divf %173, %174 : vector<16x1xf32>
    %176 = vector.broadcast %175 : vector<16x1xf32> to vector<16x32xf32>
    %177 = arith.subf %165, %176 : vector<16x32xf32>
    %178 = arith.mulf %177, %177 : vector<16x32xf32>
    %cst_68 = arith.constant dense<0.000000e+00> : vector<16xf32>
    %179 = vector.multi_reduction <add>, %178, %cst_68 [1] : vector<16x32xf32> to vector<16xf32>
    %180 = vector.shape_cast %179 : vector<16xf32> to vector<16x1xf32>
    %cst_69 = arith.constant 3.200000e+01 : f32
    %181 = vector.broadcast %cst_69 : f32 to vector<16x1xf32>
    %182 = arith.divf %180, %181 : vector<16x1xf32>
    %cst_70 = arith.constant 9.99999996E-13 : f32
    %183 = vector.broadcast %cst_70 : f32 to vector<16x1xf32>
    %184 = arith.addf %182, %183 : vector<16x1xf32>
    %185 = math.rsqrt %184 : vector<16x1xf32>
    %186 = vector.broadcast %185 : vector<16x1xf32> to vector<16x32xf32>
    %187 = arith.mulf %177, %186 : vector<16x32xf32>
    %188 = vector.broadcast %168 : vector<1x32xf32> to vector<16x32xf32>
    %189 = arith.mulf %187, %188 : vector<16x32xf32>
    %190 = vector.broadcast %171 : vector<1x32xf32> to vector<16x32xf32>
    %191 = arith.addf %189, %190 : vector<16x32xf32>
    %c1_71 = arith.constant 1 : index
    %c0_72 = arith.constant 0 : index
    %c0_73 = arith.constant 0 : index
    %192 = vector.load %arg5[%c1_71, %c0_72, %c0_73] : memref<2x32x96xf32, #tpu.memory_space<vmem>>, vector<1x32x96xf32>
    %193 = vector.shape_cast %192 : vector<1x32x96xf32> to vector<32x96xf32>
    %cst_74 = arith.constant dense<0.000000e+00> : vector<16x96xf32>
    %194 = tpu.matmul %191, %193, %cst_74 {dimension_numbers = #tpu.dot_dimension_numbers<[1], [0], [0], [1], [0, 0, 1, 1], [], []>} : vector<16x32xf32>, vector<32x96xf32>, vector<16x96xf32> -> vector<16x96xf32>
    %c13 = arith.constant 13 : index
    %c0_75 = arith.constant 0 : index
    %c0_76 = arith.constant 0 : index
    %195 = vector.load %arg4[%c13, %c0_75, %c0_76] : memref<21x1x96xf32, #tpu.memory_space<vmem>>, vector<1x1x96xf32>
    %196 = vector.shape_cast %195 : vector<1x1x96xf32> to vector<1x96xf32>
    %197 = vector.broadcast %196 : vector<1x96xf32> to vector<16x96xf32>
    %198 = arith.addf %194, %197 : vector<16x96xf32>
    %199 = vector.extract_strided_slice %198 {offsets = [0, 0], sizes = [16, 16], strides = [1, 1]} : vector<16x96xf32> to vector<16x16xf32>
    %200 = vector.shape_cast %199 : vector<16x16xf32> to vector<2x8x16xf32>
    %201 = vector.extract_strided_slice %198 {offsets = [0, 16], sizes = [16, 16], strides = [1, 1]} : vector<16x96xf32> to vector<16x16xf32>
    %202 = vector.shape_cast %201 : vector<16x16xf32> to vector<2x8x16xf32>
    %203 = tpu.concatenate %200, %202 in 0 : vector<2x8x16xf32>, vector<2x8x16xf32> -> vector<4x8x16xf32>
    %204 = vector.extract_strided_slice %198 {offsets = [0, 32], sizes = [16, 16], strides = [1, 1]} : vector<16x96xf32> to vector<16x16xf32>
    %205 = vector.shape_cast %204 : vector<16x16xf32> to vector<2x8x16xf32>
    %206 = vector.extract_strided_slice %198 {offsets = [0, 48], sizes = [16, 16], strides = [1, 1]} : vector<16x96xf32> to vector<16x16xf32>
    %207 = vector.shape_cast %206 : vector<16x16xf32> to vector<2x8x16xf32>
    %208 = tpu.concatenate %205, %207 in 0 : vector<2x8x16xf32>, vector<2x8x16xf32> -> vector<4x8x16xf32>
    %209 = vector.extract_strided_slice %198 {offsets = [0, 64], sizes = [16, 16], strides = [1, 1]} : vector<16x96xf32> to vector<16x16xf32>
    %210 = vector.shape_cast %209 : vector<16x16xf32> to vector<2x8x16xf32>
    %211 = vector.extract_strided_slice %198 {offsets = [0, 80], sizes = [16, 16], strides = [1, 1]} : vector<16x96xf32> to vector<16x16xf32>
    %212 = vector.shape_cast %211 : vector<16x16xf32> to vector<2x8x16xf32>
    %213 = tpu.concatenate %210, %212 in 0 : vector<2x8x16xf32>, vector<2x8x16xf32> -> vector<4x8x16xf32>
    "tpu.trace_start"() <{level = 10 : i32, message = "bqd,bkd->bqk"}> : () -> ()
    %cst_77 = arith.constant dense<0.000000e+00> : vector<4x8x8xf32>
    %214 = tpu.matmul %203, %208, %cst_77 {dimension_numbers = #tpu.dot_dimension_numbers<[2], [2], [1], [1], [0, 0, 0, 1, 1, 1], [0], [0]>} : vector<4x8x16xf32>, vector<4x8x16xf32>, vector<4x8x8xf32> -> vector<4x8x8xf32>
    "tpu.trace_stop"() : () -> ()
    %215 = vector.broadcast %59 : vector<4x1x8xf32> to vector<4x8x8xf32>
    %216 = arith.addf %214, %215 : vector<4x8x8xf32>
    %cst_78 = arith.constant dense<0xFF800000> : vector<4x8xf32>
    %217 = vector.multi_reduction <maximumf>, %216, %cst_78 [2] : vector<4x8x8xf32> to vector<4x8xf32>
    %218 = vector.shape_cast %217 : vector<4x8xf32> to vector<4x8x1xf32>
    %219 = vector.broadcast %218 : vector<4x8x1xf32> to vector<4x8x8xf32>
    %220 = arith.subf %216, %219 : vector<4x8x8xf32>
    %221 = math.exp %220 : vector<4x8x8xf32>
    %cst_79 = arith.constant dense<0.000000e+00> : vector<4x8xf32>
    %222 = vector.multi_reduction <add>, %221, %cst_79 [2] : vector<4x8x8xf32> to vector<4x8xf32>
    %223 = vector.shape_cast %222 : vector<4x8xf32> to vector<4x8x1xf32>
    %224 = tpu.reciprocal %223 {approx = true} : vector<4x8x1xf32> -> vector<4x8x1xf32>
    %225 = vector.broadcast %224 : vector<4x8x1xf32> to vector<4x8x8xf32>
    %226 = arith.mulf %221, %225 : vector<4x8x8xf32>
    "tpu.trace_start"() <{level = 10 : i32, message = "bqk,bkd->bqd"}> : () -> ()
    %cst_80 = arith.constant dense<0.000000e+00> : vector<4x8x16xf32>
    %227 = tpu.matmul %226, %213, %cst_80 {dimension_numbers = #tpu.dot_dimension_numbers<[2], [1], [1], [2], [0, 0, 0, 1, 1, 2], [0], [0]>} : vector<4x8x8xf32>, vector<4x8x16xf32>, vector<4x8x16xf32> -> vector<4x8x16xf32>
    "tpu.trace_stop"() : () -> ()
    %228 = vector.extract_strided_slice %227 {offsets = [0, 0, 0], sizes = [2, 8, 16], strides = [1, 1, 1]} : vector<4x8x16xf32> to vector<2x8x16xf32>
    %229 = vector.shape_cast %228 : vector<2x8x16xf32> to vector<16x16xf32>
    %230 = vector.extract_strided_slice %227 {offsets = [2, 0, 0], sizes = [2, 8, 16], strides = [1, 1, 1]} : vector<4x8x16xf32> to vector<2x8x16xf32>
    %231 = vector.shape_cast %230 : vector<2x8x16xf32> to vector<16x16xf32>
    %232 = tpu.concatenate %229, %231 in 1 : vector<16x16xf32>, vector<16x16xf32> -> vector<16x32xf32>
    %c1_81 = arith.constant 1 : index
    %c0_82 = arith.constant 0 : index
    %c0_83 = arith.constant 0 : index
    %233 = vector.load %arg6[%c1_81, %c0_82, %c0_83] : memref<2x32x96xf32, #tpu.memory_space<vmem>>, vector<1x32x96xf32>
    %234 = vector.shape_cast %233 : vector<1x32x96xf32> to vector<32x96xf32>
    %235 = vector.extract_strided_slice %234 {offsets = [0, 0], sizes = [32, 32], strides = [1, 1]} : vector<32x96xf32> to vector<32x32xf32>
    %cst_84 = arith.constant dense<0.000000e+00> : vector<16x32xf32>
    %236 = tpu.matmul %232, %235, %cst_84 {dimension_numbers = #tpu.dot_dimension_numbers<[1], [0], [0], [1], [0, 0, 1, 1], [], []>} : vector<16x32xf32>, vector<32x32xf32>, vector<16x32xf32> -> vector<16x32xf32>
    %c14 = arith.constant 14 : index
    %c0_85 = arith.constant 0 : index
    %c0_86 = arith.constant 0 : index
    %237 = vector.load %arg4[%c14, %c0_85, %c0_86] : memref<21x1x96xf32, #tpu.memory_space<vmem>>, vector<1x1x96xf32>
    %238 = vector.shape_cast %237 : vector<1x1x96xf32> to vector<1x96xf32>
    %239 = vector.extract_strided_slice %238 {offsets = [0, 0], sizes = [1, 32], strides = [1, 1]} : vector<1x96xf32> to vector<1x32xf32>
    %240 = vector.broadcast %239 : vector<1x32xf32> to vector<16x32xf32>
    %241 = arith.addf %236, %240 : vector<16x32xf32>
    %242 = arith.addf %241, %191 : vector<16x32xf32>
    %c15 = arith.constant 15 : index
    %c0_87 = arith.constant 0 : index
    %c0_88 = arith.constant 0 : index
    %243 = vector.load %arg4[%c15, %c0_87, %c0_88] : memref<21x1x96xf32, #tpu.memory_space<vmem>>, vector<1x1x96xf32>
    %244 = vector.shape_cast %243 : vector<1x1x96xf32> to vector<1x96xf32>
    %245 = vector.extract_strided_slice %244 {offsets = [0, 0], sizes = [1, 32], strides = [1, 1]} : vector<1x96xf32> to vector<1x32xf32>
    %c16 = arith.constant 16 : index
    %c0_89 = arith.constant 0 : index
    %c0_90 = arith.constant 0 : index
    %246 = vector.load %arg4[%c16, %c0_89, %c0_90] : memref<21x1x96xf32, #tpu.memory_space<vmem>>, vector<1x1x96xf32>
    %247 = vector.shape_cast %246 : vector<1x1x96xf32> to vector<1x96xf32>
    %248 = vector.extract_strided_slice %247 {offsets = [0, 0], sizes = [1, 32], strides = [1, 1]} : vector<1x96xf32> to vector<1x32xf32>
    %cst_91 = arith.constant dense<0.000000e+00> : vector<16xf32>
    %249 = vector.multi_reduction <add>, %242, %cst_91 [1] : vector<16x32xf32> to vector<16xf32>
    %250 = vector.shape_cast %249 : vector<16xf32> to vector<16x1xf32>
    %cst_92 = arith.constant 3.200000e+01 : f32
    %251 = vector.broadcast %cst_92 : f32 to vector<16x1xf32>
    %252 = arith.divf %250, %251 : vector<16x1xf32>
    %253 = vector.broadcast %252 : vector<16x1xf32> to vector<16x32xf32>
    %254 = arith.subf %242, %253 : vector<16x32xf32>
    %255 = arith.mulf %254, %254 : vector<16x32xf32>
    %cst_93 = arith.constant dense<0.000000e+00> : vector<16xf32>
    %256 = vector.multi_reduction <add>, %255, %cst_93 [1] : vector<16x32xf32> to vector<16xf32>
    %257 = vector.shape_cast %256 : vector<16xf32> to vector<16x1xf32>
    %cst_94 = arith.constant 3.200000e+01 : f32
    %258 = vector.broadcast %cst_94 : f32 to vector<16x1xf32>
    %259 = arith.divf %257, %258 : vector<16x1xf32>
    %cst_95 = arith.constant 9.99999996E-13 : f32
    %260 = vector.broadcast %cst_95 : f32 to vector<16x1xf32>
    %261 = arith.addf %259, %260 : vector<16x1xf32>
    %262 = math.rsqrt %261 : vector<16x1xf32>
    %263 = vector.broadcast %262 : vector<16x1xf32> to vector<16x32xf32>
    %264 = arith.mulf %254, %263 : vector<16x32xf32>
    %265 = vector.broadcast %245 : vector<1x32xf32> to vector<16x32xf32>
    %266 = arith.mulf %264, %265 : vector<16x32xf32>
    %267 = vector.broadcast %248 : vector<1x32xf32> to vector<16x32xf32>
    %268 = arith.addf %266, %267 : vector<16x32xf32>
    %269 = vector.extract_strided_slice %234 {offsets = [0, 32], sizes = [32, 64], strides = [1, 1]} : vector<32x96xf32> to vector<32x64xf32>
    %cst_96 = arith.constant dense<0.000000e+00> : vector<16x64xf32>
    %270 = tpu.matmul %268, %269, %cst_96 {dimension_numbers = #tpu.dot_dimension_numbers<[1], [0], [0], [1], [0, 0, 1, 1], [], []>} : vector<16x32xf32>, vector<32x64xf32>, vector<16x64xf32> -> vector<16x64xf32>
    %c17 = arith.constant 17 : index
    %c0_97 = arith.constant 0 : index
    %c0_98 = arith.constant 0 : index
    %271 = vector.load %arg4[%c17, %c0_97, %c0_98] : memref<21x1x96xf32, #tpu.memory_space<vmem>>, vector<1x1x96xf32>
    %272 = vector.shape_cast %271 : vector<1x1x96xf32> to vector<1x96xf32>
    %273 = vector.extract_strided_slice %272 {offsets = [0, 0], sizes = [1, 64], strides = [1, 1]} : vector<1x96xf32> to vector<1x64xf32>
    %274 = vector.broadcast %273 : vector<1x64xf32> to vector<16x64xf32>
    %275 = arith.addf %270, %274 : vector<16x64xf32>
    %cst_99 = arith.constant 5.000000e-01 : f32
    %276 = vector.broadcast %cst_99 : f32 to vector<16x64xf32>
    %277 = arith.mulf %276, %275 : vector<16x64xf32>
    %cst_100 = arith.constant 4.471500e-02 : f32
    %278 = vector.broadcast %cst_100 : f32 to vector<16x64xf32>
    %279 = arith.mulf %278, %275 : vector<16x64xf32>
    %280 = arith.mulf %279, %275 : vector<16x64xf32>
    %281 = arith.mulf %280, %275 : vector<16x64xf32>
    %282 = arith.addf %275, %281 : vector<16x64xf32>
    %cst_101 = arith.constant 0.797884583 : f32
    %283 = vector.broadcast %cst_101 : f32 to vector<16x64xf32>
    %284 = arith.mulf %283, %282 : vector<16x64xf32>
    %285 = math.tanh %284 : vector<16x64xf32>
    %cst_102 = arith.constant 1.000000e+00 : f32
    %286 = vector.broadcast %cst_102 : f32 to vector<16x64xf32>
    %287 = arith.addf %286, %285 : vector<16x64xf32>
    %288 = arith.mulf %277, %287 : vector<16x64xf32>
    %c1_103 = arith.constant 1 : index
    %c0_104 = arith.constant 0 : index
    %c0_105 = arith.constant 0 : index
    %289 = vector.load %arg7[%c1_103, %c0_104, %c0_105] : memref<2x64x32xf32, #tpu.memory_space<vmem>>, vector<1x64x32xf32>
    %290 = vector.shape_cast %289 : vector<1x64x32xf32> to vector<64x32xf32>
    %cst_106 = arith.constant dense<0.000000e+00> : vector<16x32xf32>
    %291 = tpu.matmul %288, %290, %cst_106 {dimension_numbers = #tpu.dot_dimension_numbers<[1], [0], [0], [1], [0, 0, 1, 1], [], []>} : vector<16x64xf32>, vector<64x32xf32>, vector<16x32xf32> -> vector<16x32xf32>
    %c18 = arith.constant 18 : index
    %c0_107 = arith.constant 0 : index
    %c0_108 = arith.constant 0 : index
    %292 = vector.load %arg4[%c18, %c0_107, %c0_108] : memref<21x1x96xf32, #tpu.memory_space<vmem>>, vector<1x1x96xf32>
    %293 = vector.shape_cast %292 : vector<1x1x96xf32> to vector<1x96xf32>
    %294 = vector.extract_strided_slice %293 {offsets = [0, 0], sizes = [1, 32], strides = [1, 1]} : vector<1x96xf32> to vector<1x32xf32>
    %295 = vector.broadcast %294 : vector<1x32xf32> to vector<16x32xf32>
    %296 = arith.addf %291, %295 : vector<16x32xf32>
    %297 = arith.addf %296, %268 : vector<16x32xf32>
    %c19 = arith.constant 19 : index
    %c0_109 = arith.constant 0 : index
    %c0_110 = arith.constant 0 : index
    %298 = vector.load %arg4[%c19, %c0_109, %c0_110] : memref<21x1x96xf32, #tpu.memory_space<vmem>>, vector<1x1x96xf32>
    %299 = vector.shape_cast %298 : vector<1x1x96xf32> to vector<1x96xf32>
    %300 = vector.extract_strided_slice %299 {offsets = [0, 0], sizes = [1, 32], strides = [1, 1]} : vector<1x96xf32> to vector<1x32xf32>
    %c20 = arith.constant 20 : index
    %c0_111 = arith.constant 0 : index
    %c0_112 = arith.constant 0 : index
    %301 = vector.load %arg4[%c20, %c0_111, %c0_112] : memref<21x1x96xf32, #tpu.memory_space<vmem>>, vector<1x1x96xf32>
    %302 = vector.shape_cast %301 : vector<1x1x96xf32> to vector<1x96xf32>
    %303 = vector.extract_strided_slice %302 {offsets = [0, 0], sizes = [1, 32], strides = [1, 1]} : vector<1x96xf32> to vector<1x32xf32>
    %cst_113 = arith.constant dense<0.000000e+00> : vector<16xf32>
    %304 = vector.multi_reduction <add>, %297, %cst_113 [1] : vector<16x32xf32> to vector<16xf32>
    %305 = vector.shape_cast %304 : vector<16xf32> to vector<16x1xf32>
    %cst_114 = arith.constant 3.200000e+01 : f32
    %306 = vector.broadcast %cst_114 : f32 to vector<16x1xf32>
    %307 = arith.divf %305, %306 : vector<16x1xf32>
    %308 = vector.broadcast %307 : vector<16x1xf32> to vector<16x32xf32>
    %309 = arith.subf %297, %308 : vector<16x32xf32>
    %310 = arith.mulf %309, %309 : vector<16x32xf32>
    %cst_115 = arith.constant dense<0.000000e+00> : vector<16xf32>
    %311 = vector.multi_reduction <add>, %310, %cst_115 [1] : vector<16x32xf32> to vector<16xf32>
    %312 = vector.shape_cast %311 : vector<16xf32> to vector<16x1xf32>
    %cst_116 = arith.constant 3.200000e+01 : f32
    %313 = vector.broadcast %cst_116 : f32 to vector<16x1xf32>
    %314 = arith.divf %312, %313 : vector<16x1xf32>
    %cst_117 = arith.constant 9.99999996E-13 : f32
    %315 = vector.broadcast %cst_117 : f32 to vector<16x1xf32>
    %316 = arith.addf %314, %315 : vector<16x1xf32>
    %317 = math.rsqrt %316 : vector<16x1xf32>
    %318 = vector.broadcast %317 : vector<16x1xf32> to vector<16x32xf32>
    %319 = arith.mulf %309, %318 : vector<16x32xf32>
    %320 = vector.broadcast %300 : vector<1x32xf32> to vector<16x32xf32>
    %321 = arith.mulf %319, %320 : vector<16x32xf32>
    %322 = vector.broadcast %303 : vector<1x32xf32> to vector<16x32xf32>
    %323 = arith.addf %321, %322 : vector<16x32xf32>
    %c80 = arith.constant 80 : index
    %c0_118 = arith.constant 0 : index
    %324 = vector.load %arg3[%c80, %c0_118] : memref<112x32xf32, #tpu.memory_space<vmem>>, vector<32x32xf32>
    %c4 = arith.constant 4 : index
    %c0_119 = arith.constant 0 : index
    %c0_120 = arith.constant 0 : index
    %325 = vector.load %arg4[%c4, %c0_119, %c0_120] : memref<21x1x96xf32, #tpu.memory_space<vmem>>, vector<1x1x96xf32>
    %326 = vector.shape_cast %325 : vector<1x1x96xf32> to vector<1x96xf32>
    %327 = vector.extract_strided_slice %326 {offsets = [0, 0], sizes = [1, 32], strides = [1, 1]} : vector<1x96xf32> to vector<1x32xf32>
    %328 = vector.extract_strided_slice %323 {offsets = [0, 0], sizes = [1, 32], strides = [1, 1]} : vector<16x32xf32> to vector<1x32xf32>
    %329 = vector.extract_strided_slice %323 {offsets = [8, 0], sizes = [1, 32], strides = [1, 1]} : vector<16x32xf32> to vector<1x32xf32>
    %330 = tpu.concatenate %328, %329 in 0 : vector<1x32xf32>, vector<1x32xf32> -> vector<2x32xf32>
    %cst_121 = arith.constant dense<0.000000e+00> : vector<2x32xf32>
    %331 = tpu.matmul %330, %324, %cst_121 {dimension_numbers = #tpu.dot_dimension_numbers<[1], [0], [0], [1], [0, 0, 1, 1], [], []>} : vector<2x32xf32>, vector<32x32xf32>, vector<2x32xf32> -> vector<2x32xf32>
    %332 = vector.broadcast %327 : vector<1x32xf32> to vector<2x32xf32>
    %333 = arith.addf %331, %332 : vector<2x32xf32>
    %334 = math.tanh %333 : vector<2x32xf32>
    %c0_122 = arith.constant 0 : index
    %c0_123 = arith.constant 0 : index
    %335 = vector.load %arg8[%c0_122, %c0_123] : memref<2x32xf32, #tpu.memory_space<vmem>>, vector<2x32xf32>
    tpu.vector_store %arg8[%c0_122, %c0_123], %334 {strides = array<i32>} : memref<2x32xf32, #tpu.memory_space<vmem>>, vector<2x32xf32>,
    return
  }
}

</mosaic_0001>

<llo_original>
// kernel: model_base_forward.1
$region0: #{model_base_forward.1}
  #allocation0 [shape = 'u32[]', space=smem, size = 0x4, offset = 0x4, fixed_abs, tag = 'smem constant byte address 0x4 - core index']
  #allocation1 [shape = 'u32[72,128]{1,0:T(1,128)}', space=vmem, size = 0x9000, scoped, tag = 'internal scratch']
  %s0 = inlined_call_operand.vmem [shape: s32[16,1], index: 0, kind: input, shape index: {}]
  %s1 = inlined_call_operand.vmem [shape: s32[16,1], index: 1, kind: input, shape index: {}]
  %s2 = inlined_call_operand.vmem [shape: s32[2,8], index: 2, kind: input, shape index: {}]
  %s3 = inlined_call_operand.vmem [shape: f32[112,32], index: 3, kind: input, shape index: {}]
  %s4 = inlined_call_operand.vmem [shape: f32[21,1,96], index: 4, kind: input, shape index: {}]
  %s5 = inlined_call_operand.vmem [shape: f32[2,32,96], index: 5, kind: input, shape index: {}]
  %s6 = inlined_call_operand.vmem [shape: f32[2,32,96], index: 6, kind: input, shape index: {}]
  %s7 = inlined_call_operand.vmem [shape: f32[2,64,32], index: 7, kind: input, shape index: {}]
  %s8 = inlined_call_operand.hbm [shape: f32[2,32], index: 8, kind: output, shape index: {}]
  %s9 = sld [smem:[#allocation0]]
  $region42: #{model_base_forward.1} parent=0
    _
  %s11 = ssub.s32 1, %s9
  %s12 = scalar_select 0, %s11, %s9
  $region1: #{model_base_forward.1} parent=0
    #allocation2 [shape = 'u8[1024]{0}', space=vmem, size = 0x400, scoped, tag = 'output window, operand 0, single buffered']
    #allocation3 [shape = 's32[1]{0}', space=sflag, size = 0x4, scoped, tag = 'scoped memory for model_base_forward.1']
    %13 = vsyncpa [#allocation3], 0
    // Predicated region
    $region2: #{model_base_forward.1} parent=1 // pred_check
      _
    $region3: #{model_base_forward.1} parent=1 // pred_check_branch
      %15 = sbr.rel (0) target = $region5
    $region4: #{model_base_forward.1} parent=1 // pred_region
      _
    $region5: #{model_base_forward.1} parent=1 // pred_fallthru
      _
    // Predicated region
    $region6: #{model_base_forward.1} parent=1 // pred_check
      _
    $region7: #{model_base_forward.1} parent=1 // pred_check_branch
      %17 = sbr.rel (0) target = $region9
    $region8: #{model_base_forward.1} parent=1 // pred_region
      _
    $region9: #{model_base_forward.1} parent=1 // pred_fallthru
      _
    // Predicated region
    $region10: #{model_base_forward.1} parent=1 // pred_check
      _
    $region11: #{model_base_forward.1} parent=1 // pred_check_branch
      %19 = sbr.rel (0) target = $region13
    $region12: #{model_base_forward.1} parent=1 // pred_region
      _
    $region13: #{model_base_forward.1} parent=1 // pred_fallthru
      _
    // Predicated region
    $region14: #{model_base_forward.1} parent=1 // pred_check
      _
    $region15: #{model_base_forward.1} parent=1 // pred_check_branch
      %21 = sbr.rel (0) target = $region17
    $region16: #{model_base_forward.1} parent=1 // pred_region
      _
    $region17: #{model_base_forward.1} parent=1 // pred_fallthru
      _
    // Predicated region
    $region18: #{model_base_forward.1} parent=1 // pred_check
      _
    $region19: #{model_base_forward.1} parent=1 // pred_check_branch
      %23 = sbr.rel (0) target = $region21
    $region20: #{model_base_forward.1} parent=1 // pred_region
      _
    $region21: #{model_base_forward.1} parent=1 // pred_fallthru
      _
    // Predicated region
    $region22: #{model_base_forward.1} parent=1 // pred_check
      _
    $region23: #{model_base_forward.1} parent=1 // pred_check_branch
      %25 = sbr.rel (0) target = $region25
    $region24: #{model_base_forward.1} parent=1 // pred_region
      _
    $region25: #{model_base_forward.1} parent=1 // pred_fallthru
      _
    // Predicated region
    $region26: #{model_base_forward.1} parent=1 // pred_check
      _
    $region27: #{model_base_forward.1} parent=1 // pred_check_branch
      %27 = sbr.rel (0) target = $region29
    $region28: #{model_base_forward.1} parent=1 // pred_region
      _
    $region29: #{model_base_forward.1} parent=1 // pred_fallthru
      _
    // Predicated region
    $region30: #{model_base_forward.1} parent=1 // pred_check
      _
    $region31: #{model_base_forward.1} parent=1 // pred_check_branch
      %29 = sbr.rel (0) target = $region33
    $region32: #{model_base_forward.1} parent=1 // pred_region
      _
    $region33: #{model_base_forward.1} parent=1 // pred_fallthru
      _
    %v30 = vld [vmem:[%s3] sm:$0xff]
    %v31 = vld [vmem:[%s3 + $0x8] sm:$0xff]
    %v32 = vld [vmem:[%s3 + $0x10] sm:$0xff]
    %v33 = vld [vmem:[%s3 + $0x18] sm:$0xff]
    %v34 = vld [vmem:[%s3 + $0x20] sm:$0xff]
    %v35 = vld [vmem:[%s3 + $0x28] sm:$0xff]
    %v36 = vld [vmem:[%s3 + $0x30] sm:$0xff]
    %v37 = vld [vmem:[%s3 + $0x38] sm:$0xff]
    %v38 = vld [vmem:[%s0] sm:$0xff]
    %v39 = vld [vmem:[%s0 + $0x8] sm:$0xff]
    %v40 = vlaneseq
    %v41 = vand.u32 %v40, 127
    %42 = vset.pattern.permute.xlu0 0
    %43 = vperm.xlu0 %42, %v38
    %v44 = vpop.permute.xlu0 %43
    %45 = vset.pattern.permute.xlu0 0
    %46 = vperm.xlu0 %45, %v39
    %v47 = vpop.permute.xlu0 %46
    %vm48 = vcmp.eq.s32.totalorder %v44, %v41
    %vm49 = vcmp.eq.s32.totalorder %v47, %v41
    %v50 = vsel %vm48, 1, 0
    %v51 = vsel %vm49, 1, 0
    %v52 = vcvt.s32.f32 %v50
    %v53 = vcvt.s32.f32 %v51
    %v54 = vld [vmem:[%s3 + $0x40] sm:$0xff]
    %vm55 = vcmask 523264
    %v57 = vsel %vm55, %v52, 0
    %v60 = vsel %vm55, %v53, 0
    %62 = vmatpush.msra.mxu0 0.0
    %63 = vmatpush.msra.mxu0 0.0
    %64 = vmatpush.msra.mxu0 0.0
    %65 = vmatpush.msra.mxu0 0.0
    %66 = vmatpush.msra.mxu0 0.0
    %67 = vmatpush.msra.mxu0 0.0
    %68 = vmatpush.msra.mxu0 0.0
    %69 = vmatpush.msra.mxu0 0.0
    %70 = vmatpush.msra.mxu0 %v37
    %71 = vmatpush.msra.mxu0 %v36
    %72 = vmatpush.msra.mxu0 %v35
    %73 = vmatpush.msra.mxu0 %v34
    %74 = vmatpush.msra.mxu0 %v33
    %75 = vmatpush.msra.mxu0 %v32
    %76 = vmatpush.msra.mxu0 %v31
    %77 = vmatpush.msra.mxu0 %v30
    %78 = vmatmul.f32.gmra.mxu0 %v57
    %v79 = vpop.f32.mrf.mxu0
    %v80 = vadd.f32 %v54, %v79
    %81 = vmatmul.f32.gmra.mxu0 %v60
    %v82 = vpop.f32.mrf.mxu0
    %v83 = vadd.f32 %v54, %v82
    %84 = vdwg.mxu0
    %s85 = scalar_lea.vmem %s4, 2
    %v86 = vld [vmem:[%s85] sm:$0x1]
    %s87 = scalar_lea.vmem %s4, 3
    %v88 = vld [vmem:[%s87] sm:$0x1]
    %v89 = vld [vmem:[%s1] sm:$0xff]
    %v90 = vld [vmem:[%s1 + $0x8] sm:$0xff]
    %v91 = vcvt.s32.f32 %v89
    %v92 = vcvt.s32.f32 %v90
    %v94 = vperm.slane %v86, 0
    %v96 = vadd.f32 %v80, %v94
    %v97 = vadd.f32 %v83, %v94
    %v98 = vsub.f32 %v88, %v86
    %100 = vset.pattern.permute.xlu0 0
    %101 = vperm.xlu0 %100, %v91
    %v102 = vpop.permute.xlu0 %101
    %105 = vset.pattern.permute.xlu0 0
    %106 = vperm.xlu0 %105, %v92
    %v107 = vpop.permute.xlu0 %106
    %v110 = vperm.slane %v98, 0
    %v112 = vmul.f32 %v102, %v110
    %v113 = vmul.f32 %v107, %v110
    %v114 = vadd.f32 %v96, %v112
    %v115 = vadd.f32 %v97, %v113
    %v116 = vld [vmem:[%s4] sm:$0x1]
    %s117 = scalar_lea.vmem %s4, 1
    %v118 = vld [vmem:[%s117] sm:$0x1]
    %vm119 = vcmask 261120
    %v120 = vsel %vm119, %v114, 0.0
    %121 = vadd.xlane.f32.xlu0 %v120
    %v122 = vpop.xlane.xlu0 %121
    %v123 = vsel %vm119, %v115, 0.0
    %124 = vadd.xlane.f32.xlu0 %v123
    %v125 = vpop.xlane.xlu0 %124
    %v126 = vrcp.pop 32.0
    %v127 = vmul.f32 32.0, %v126
    %v128 = vsub.f32 1.0, %v127
    %v129 = vmul.f32 %v126, %v128
    %v130 = vadd.f32 %v126, %v129
    %vm131 = vweird.f32 %v126
    %v132 = vsel %vm131, %v126, %v130
    %v133 = vmul.f32 %v122, %v132
    %v134 = vmul.f32 %v125, %v132
    %v135 = vsub.f32 %v114, %v133
    %v136 = vsub.f32 %v115, %v134
    %v137 = vmul.f32 %v135, %v135
    %v138 = vmul.f32 %v136, %v136
    %v139 = vsel %vm119, %v137, 0.0
    %140 = vadd.xlane.f32.xlu0 %v139
    %v141 = vpop.xlane.xlu0 %140
    %v142 = vsel %vm119, %v138, 0.0
    %143 = vadd.xlane.f32.xlu0 %v142
    %v144 = vpop.xlane.xlu0 %143
    %v145 = vmul.f32 %v141, %v132
    %v146 = vmul.f32 %v144, %v132
    %v147 = vadd.f32 %v145, 1e-12
    %v148 = vadd.f32 %v146, 1e-12
    %v149 = vrsqrt.pop %v147
    %v150 = vmul.f32 %v149, %v147
    %v151 = vmul.f32 %v150, %v149
    %v152 = vmul.f32 0.5, %v151
    %v153 = vsub.f32 1.5, %v152
    %v154 = vmul.f32 %v149, %v153
    %vm155 = vweird.f32 %v147
    %vm156 = vweird.f32 %v149
    %vm157 = vmor %vm155, %vm156
    %v158 = vsel %vm157, %v149, %v154
    %v159 = vrsqrt.pop %v148
    %v160 = vmul.f32 %v159, %v148
    %v161 = vmul.f32 %v160, %v159
    %v162 = vmul.f32 0.5, %v161
    %v163 = vsub.f32 1.5, %v162
    %v164 = vmul.f32 %v159, %v163
    %vm165 = vweird.f32 %v148
    %vm166 = vweird.f32 %v159
    %vm167 = vmor %vm165, %vm166
    %v168 = vsel %vm167, %v159, %v164
    %v169 = vmul.f32 %v135, %v158
    %v170 = vmul.f32 %v136, %v168
    %v172 = vperm.slane %v116, 0
    %v174 = vmul.f32 %v169, %v172
    %v175 = vmul.f32 %v170, %v172
    %v177 = vperm.slane %v118, 0
    %v179 = vadd.f32 %v174, %v177
    %v180 = vadd.f32 %v175, %v177
    %v181 = vld [vmem:[%s2] sm:$0x3]
    %v182 = vcvt.s32.f32 %v181
    %v183 = vsub.f32 1.0, %v182
    %v184 = vmul.f32 %v183, -10000.0
    %v186 = vrot.slane %v184, 6
    %vm188 = vcmask 1041408
    %v189 = vsel %vm188, %v184, %v186
    %v191 = vrot.slane %v189, 1
    %v192 = vrot.slane %v189, 2
    %v193 = vrot.slane %v189, 3
    %v194 = vld [vmem:[%s5] sm:$0xff]
    %v195 = vld [vmem:[%s5 + $0x8] sm:$0xff]
    %v196 = vld [vmem:[%s5 + $0x10] sm:$0xff]
    %v197 = vld [vmem:[%s5 + $0x18] sm:$0xff]
    %s198 = scalar_lea.vmem %s4, 5
    %v199 = vld [vmem:[%s198] sm:$0x1]
    %v201 = vperm.slane %v199, 0
    %v204 = vsel %vm119, %v179, 0
    %v207 = vsel %vm119, %v180, 0
    %209 = vmatpush.msra.mxu0 0.0
    %210 = vmatpush.msra.mxu0 0.0
    %211 = vmatpush.msra.mxu0 0.0
    %212 = vmatpush.msra.mxu0 0.0
    %213 = vmatpush.msra.mxu0 0.0
    %214 = vmatpush.msra.mxu0 0.0
    %215 = vmatpush.msra.mxu0 0.0
    %216 = vmatpush.msra.mxu0 0.0
    %217 = vmatpush.msra.mxu0 0.0
    %218 = vmatpush.msra.mxu0 0.0
    %219 = vmatpush.msra.mxu0 0.0
    %220 = vmatpush.msra.mxu0 0.0
    %221 = vmatpush.msra.mxu0 %v197
    %222 = vmatpush.msra.mxu0 %v196
    %223 = vmatpush.msra.mxu0 %v195
    %224 = vmatpush.msra.mxu0 %v194
    %225 = vmatmul.f32.gmra.mxu0 %v204
    %v226 = vpop.f32.mrf.mxu0
    %v227 = vadd.f32 %v201, %v226
    %228 = vmatmul.f32.gmra.mxu0 %v207
    %v229 = vpop.f32.mrf.mxu0
    %v230 = vadd.f32 %v201, %v229
    %231 = vdwg.mxu0
    %234 = vrot.lane.b32.xlu0 %v227, 112
    %v235 = vpop.permute.xlu0 %234
    %236 = vrot.lane.b32.xlu0 %v230, 112
    %v237 = vpop.permute.xlu0 %236
    %v238 = vperm.slane %v189, 0
    %v239 = vperm.slane %v191, 0
    %v240 = vperm.slane %v192, 0
    %v241 = vperm.slane %v193, 0
    %246 = vrot.lane.b32.xlu0 %v227, 96
    %v247 = vpop.permute.xlu0 %246
    %vm248 = vcmask 130048
    %v249 = vsel %vm248, %v227, 0
    %v251 = vsel %vm248, %v247, 0
    %253 = vmatpush.xpose.msra.mxu0 0.0
    %254 = vmatpush.xpose.msra.mxu0 0.0
    %255 = vmatpush.xpose.msra.mxu0 0.0
    %256 = vmatpush.xpose.msra.mxu0 0.0
    %257 = vmatpush.xpose.msra.mxu0 0.0
    %258 = vmatpush.xpose.msra.mxu0 0.0
    %259 = vmatpush.xpose.msra.mxu0 0.0
    %260 = vmatpush.xpose.msra.mxu0 0.0
    %261 = vmatpush.xpose.msra.mxu0 0.0
    %262 = vmatpush.xpose.msra.mxu0 0.0
    %263 = vmatpush.xpose.msra.mxu0 0.0
    %264 = vmatpush.xpose.msra.mxu0 0.0
    %265 = vmatpush.xpose.msra.mxu0 0.0
    %266 = vmatpush.xpose.msra.mxu0 0.0
    %267 = vmatpush.xpose.msra.mxu0 0.0
    %268 = vmatpush.xpose.msra.mxu0 %v251
    %269 = vmatmul.f32.gmra.mxu0 %v249
    %v270 = vpop.f32.mrf.mxu0
    %v271 = vadd.f32 %v238, %v270
    %272 = vdwg.mxu0
    %273 = vrot.lane.b32.xlu0 %v230, 96
    %v274 = vpop.permute.xlu0 %273
    %v275 = vsel %vm248, %v230, 0
    %v277 = vsel %vm248, %v274, 0
    %279 = vmatpush.xpose.msra.mxu0 0.0
    %280 = vmatpush.xpose.msra.mxu0 0.0
    %281 = vmatpush.xpose.msra.mxu0 0.0
    %282 = vmatpush.xpose.msra.mxu0 0.0
    %283 = vmatpush.xpose.msra.mxu0 0.0
    %284 = vmatpush.xpose.msra.mxu0 0.0
    %285 = vmatpush.xpose.msra.mxu0 0.0
    %286 = vmatpush.xpose.msra.mxu0 0.0
    %287 = vmatpush.xpose.msra.mxu0 0.0
    %288 = vmatpush.xpose.msra.mxu0 0.0
    %289 = vmatpush.xpose.msra.mxu0 0.0
    %290 = vmatpush.xpose.msra.mxu0 0.0
    %291 = vmatpush.xpose.msra.mxu0 0.0
    %292 = vmatpush.xpose.msra.mxu0 0.0
    %293 = vmatpush.xpose.msra.mxu0 0.0
    %294 = vmatpush.xpose.msra.mxu0 %v277
    %295 = vmatmul.f32.gmra.mxu0 %v275
    %v296 = vpop.f32.mrf.mxu0
    %v297 = vadd.f32 %v239, %v296
    %298 = vdwg.mxu0
    %299 = vrot.lane.b32.xlu0 %v235, 96
    %v300 = vpop.permute.xlu0 %299
    %v301 = vsel %vm248, %v235, 0
    %v303 = vsel %vm248, %v300, 0
    %305 = vmatpush.xpose.msra.mxu0 0.0
    %306 = vmatpush.xpose.msra.mxu0 0.0
    %307 = vmatpush.xpose.msra.mxu0 0.0
    %308 = vmatpush.xpose.msra.mxu0 0.0
    %309 = vmatpush.xpose.msra.mxu0 0.0
    %310 = vmatpush.xpose.msra.mxu0 0.0
    %311 = vmatpush.xpose.msra.mxu0 0.0
    %312 = vmatpush.xpose.msra.mxu0 0.0
    %313 = vmatpush.xpose.msra.mxu0 0.0
    %314 = vmatpush.xpose.msra.mxu0 0.0
    %315 = vmatpush.xpose.msra.mxu0 0.0
    %316 = vmatpush.xpose.msra.mxu0 0.0
    %317 = vmatpush.xpose.msra.mxu0 0.0
    %318 = vmatpush.xpose.msra.mxu0 0.0
    %319 = vmatpush.xpose.msra.mxu0 0.0
    %320 = vmatpush.xpose.msra.mxu0 %v303
    %321 = vmatmul.f32.gmra.mxu0 %v301
    %v322 = vpop.f32.mrf.mxu0
    %v323 = vadd.f32 %v240, %v322
    %324 = vdwg.mxu0
    %325 = vrot.lane.b32.xlu0 %v237, 96
    %v326 = vpop.permute.xlu0 %325
    %v327 = vsel %vm248, %v237, 0
    %v329 = vsel %vm248, %v326, 0
    %331 = vmatpush.xpose.msra.mxu0 0.0
    %332 = vmatpush.xpose.msra.mxu0 0.0
    %333 = vmatpush.xpose.msra.mxu0 0.0
    %334 = vmatpush.xpose.msra.mxu0 0.0
    %335 = vmatpush.xpose.msra.mxu0 0.0
    %336 = vmatpush.xpose.msra.mxu0 0.0
    %337 = vmatpush.xpose.msra.mxu0 0.0
    %338 = vmatpush.xpose.msra.mxu0 0.0
    %339 = vmatpush.xpose.msra.mxu0 0.0
    %340 = vmatpush.xpose.msra.mxu0 0.0
    %341 = vmatpush.xpose.msra.mxu0 0.0
    %342 = vmatpush.xpose.msra.mxu0 0.0
    %343 = vmatpush.xpose.msra.mxu0 0.0
    %344 = vmatpush.xpose.msra.mxu0 0.0
    %345 = vmatpush.xpose.msra.mxu0 0.0
    %346 = vmatpush.xpose.msra.mxu0 %v329
    %347 = vmatmul.f32.gmra.mxu0 %v327
    %v348 = vpop.f32.mrf.mxu0
    %v349 = vadd.f32 %v241, %v348
    %350 = vdwg.mxu0
    %vm351 = vcmask 64512
    %v352 = vsel %vm351, %v271, -inf
    %353 = vmax.xlane.f32.xlu0 %v352
    %v354 = vpop.xlane.xlu0 %353
    %v355 = vsel %vm351, %v297, -inf
    %356 = vmax.xlane.f32.xlu0 %v355
    %v357 = vpop.xlane.xlu0 %356
    %v358 = vsel %vm351, %v323, -inf
    %359 = vmax.xlane.f32.xlu0 %v358
    %v360 = vpop.xlane.xlu0 %359
    %v361 = vsel %vm351, %v349, -inf
    %362 = vmax.xlane.f32.xlu0 %v361
    %v363 = vpop.xlane.xlu0 %362
    %v364 = vsub.f32 %v271, %v354
    %v365 = vsub.f32 %v297, %v357
    %v366 = vsub.f32 %v323, %v360
    %v367 = vsub.f32 %v349, %v363
    %v368 = vmul.f32 %v364, 1.442695
    %v369 = vpow.pop %v368
    %v370 = vmul.f32 %v365, 1.442695
    %v371 = vpow.pop %v370
    %v372 = vmul.f32 %v366, 1.442695
    %v373 = vpow.pop %v372
    %v374 = vmul.f32 %v367, 1.442695
    %v375 = vpow.pop %v374
    %v376 = vsel %vm351, %v369, 0.0
    %377 = vadd.xlane.f32.xlu0 %v376
    %v378 = vpop.xlane.xlu0 %377
    %v379 = vsel %vm351, %v371, 0.0
    %380 = vadd.xlane.f32.xlu0 %v379
    %v381 = vpop.xlane.xlu0 %380
    %v382 = vsel %vm351, %v373, 0.0
    %383 = vadd.xlane.f32.xlu0 %v382
    %v384 = vpop.xlane.xlu0 %383
    %v385 = vsel %vm351, %v375, 0.0
    %386 = vadd.xlane.f32.xlu0 %v385
    %v387 = vpop.xlane.xlu0 %386
    %v388 = vrcp.pop %v378
    %v389 = vrcp.pop %v381
    %v390 = vrcp.pop %v384
    %v391 = vrcp.pop %v387
    %v392 = vmul.f32 %v369, %v388
    %v393 = vmul.f32 %v371, %v389
    %v394 = vmul.f32 %v373, %v390
    %v395 = vmul.f32 %v375, %v391
    %396 = vrot.lane.b32.xlu0 %v227, 64
    %v397 = vpop.permute.xlu0 %396
    %v400 = vsel %vm351, %v392, 0
    %402 = vmatpush.msra.mxu0 0.0
    %403 = vmatpush.msra.mxu0 0.0
    %404 = vmatpush.msra.mxu0 0.0
    %405 = vmatpush.msra.mxu0 0.0
    %406 = vmatpush.msra.mxu0 0.0
    %407 = vmatpush.msra.mxu0 0.0
    %408 = vmatpush.msra.mxu0 0.0
    %409 = vmatpush.msra.mxu0 0.0
    %410 = vmatpush.msra.mxu0 0.0
    %411 = vmatpush.msra.mxu0 0.0
    %412 = vmatpush.msra.mxu0 0.0
    %413 = vmatpush.msra.mxu0 0.0
    %414 = vmatpush.msra.mxu0 0.0
    %415 = vmatpush.msra.mxu0 0.0
    %416 = vmatpush.msra.mxu0 0.0
    %417 = vmatpush.msra.mxu0 %v397
    %418 = vmatmul.f32.gmra.mxu0 %v400
    %v419 = vpop.f32.mrf.mxu0
    %v420 = vadd.f32 0.0, %v419
    %421 = vdwg.mxu0
    %422 = vrot.lane.b32.xlu0 %v230, 64
    %v423 = vpop.permute.xlu0 %422
    %v426 = vsel %vm351, %v393, 0
    %428 = vmatpush.msra.mxu0 0.0
    %429 = vmatpush.msra.mxu0 0.0
    %430 = vmatpush.msra.mxu0 0.0
    %431 = vmatpush.msra.mxu0 0.0
    %432 = vmatpush.msra.mxu0 0.0
    %433 = vmatpush.msra.mxu0 0.0
    %434 = vmatpush.msra.mxu0 0.0
    %435 = vmatpush.msra.mxu0 0.0
    %436 = vmatpush.msra.mxu0 0.0
    %437 = vmatpush.msra.mxu0 0.0
    %438 = vmatpush.msra.mxu0 0.0
    %439 = vmatpush.msra.mxu0 0.0
    %440 = vmatpush.msra.mxu0 0.0
    %441 = vmatpush.msra.mxu0 0.0
    %442 = vmatpush.msra.mxu0 0.0
    %443 = vmatpush.msra.mxu0 %v423
    %444 = vmatmul.f32.gmra.mxu0 %v426
    %v445 = vpop.f32.mrf.mxu0
    %v446 = vadd.f32 0.0, %v445
    %447 = vdwg.mxu0
    %448 = vrot.lane.b32.xlu0 %v235, 64
    %v449 = vpop.permute.xlu0 %448
    %v452 = vsel %vm351, %v394, 0
    %454 = vmatpush.msra.mxu0 0.0
    %455 = vmatpush.msra.mxu0 0.0
    %456 = vmatpush.msra.mxu0 0.0
    %457 = vmatpush.msra.mxu0 0.0
    %458 = vmatpush.msra.mxu0 0.0
    %459 = vmatpush.msra.mxu0 0.0
    %460 = vmatpush.msra.mxu0 0.0
    %461 = vmatpush.msra.mxu0 0.0
    %462 = vmatpush.msra.mxu0 0.0
    %463 = vmatpush.msra.mxu0 0.0
    %464 = vmatpush.msra.mxu0 0.0
    %465 = vmatpush.msra.mxu0 0.0
    %466 = vmatpush.msra.mxu0 0.0
    %467 = vmatpush.msra.mxu0 0.0
    %468 = vmatpush.msra.mxu0 0.0
    %469 = vmatpush.msra.mxu0 %v449
    %470 = vmatmul.f32.gmra.mxu0 %v452
    %v471 = vpop.f32.mrf.mxu0
    %v472 = vadd.f32 0.0, %v471
    %473 = vdwg.mxu0
    %474 = vrot.lane.b32.xlu0 %v237, 64
    %v475 = vpop.permute.xlu0 %474
    %v478 = vsel %vm351, %v395, 0
    %480 = vmatpush.msra.mxu0 0.0
    %481 = vmatpush.msra.mxu0 0.0
    %482 = vmatpush.msra.mxu0 0.0
    %483 = vmatpush.msra.mxu0 0.0
    %484 = vmatpush.msra.mxu0 0.0
    %485 = vmatpush.msra.mxu0 0.0
    %486 = vmatpush.msra.mxu0 0.0
    %487 = vmatpush.msra.mxu0 0.0
    %488 = vmatpush.msra.mxu0 0.0
    %489 = vmatpush.msra.mxu0 0.0
    %490 = vmatpush.msra.mxu0 0.0
    %491 = vmatpush.msra.mxu0 0.0
    %492 = vmatpush.msra.mxu0 0.0
    %493 = vmatpush.msra.mxu0 0.0
    %494 = vmatpush.msra.mxu0 0.0
    %495 = vmatpush.msra.mxu0 %v475
    %496 = vmatmul.f32.gmra.mxu0 %v478
    %v497 = vpop.f32.mrf.mxu0
    %v498 = vadd.f32 0.0, %v497
    %499 = vdwg.mxu0
    %502 = vrot.lane.b32.xlu0 %v472, 16
    %v503 = vpop.permute.xlu0 %502
    %504 = vrot.lane.b32.xlu0 %v498, 16
    %v505 = vpop.permute.xlu0 %504
    %v508 = vsel %vm248, %v420, %v503
    %v509 = vsel %vm248, %v446, %v505
    %v510 = vld [vmem:[%s6] sm:$0xff]
    %v511 = vld [vmem:[%s6 + $0x8] sm:$0xff]
    %v512 = vld [vmem:[%s6 + $0x10] sm:$0xff]
    %v513 = vld [vmem:[%s6 + $0x18] sm:$0xff]
    %s514 = scalar_lea.vmem %s4, 6
    %v515 = vld [vmem:[%s514] sm:$0x1]
    %v517 = vperm.slane %v515, 0
    %v520 = vsel %vm119, %v508, 0
    %v523 = vsel %vm119, %v509, 0
    %525 = vmatpush.msra.mxu0 0.0
    %526 = vmatpush.msra.mxu0 0.0
    %527 = vmatpush.msra.mxu0 0.0
    %528 = vmatpush.msra.mxu0 0.0
    %529 = vmatpush.msra.mxu0 0.0
    %530 = vmatpush.msra.mxu0 0.0
    %531 = vmatpush.msra.mxu0 0.0
    %532 = vmatpush.msra.mxu0 0.0
    %533 = vmatpush.msra.mxu0 0.0
    %534 = vmatpush.msra.mxu0 0.0
    %535 = vmatpush.msra.mxu0 0.0
    %536 = vmatpush.msra.mxu0 0.0
    %537 = vmatpush.msra.mxu0 %v513
    %538 = vmatpush.msra.mxu0 %v512
    %539 = vmatpush.msra.mxu0 %v511
    %540 = vmatpush.msra.mxu0 %v510
    %541 = vmatmul.f32.gmra.mxu0 %v520
    %v542 = vpop.f32.mrf.mxu0
    %v543 = vadd.f32 %v517, %v542
    %544 = vmatmul.f32.gmra.mxu0 %v523
    %v545 = vpop.f32.mrf.mxu0
    %v546 = vadd.f32 %v517, %v545
    %547 = vdwg.mxu0
    %v548 = vadd.f32 %v543, %v179
    %v549 = vadd.f32 %v546, %v180
    %s550 = scalar_lea.vmem %s4, 7
    %v551 = vld [vmem:[%s550] sm:$0x1]
    %s552 = scalar_lea.vmem %s4, 8
    %v553 = vld [vmem:[%s552] sm:$0x1]
    %v554 = vsel %vm119, %v548, 0.0
    %555 = vadd.xlane.f32.xlu0 %v554
    %v556 = vpop.xlane.xlu0 %555
    %v557 = vsel %vm119, %v549, 0.0
    %558 = vadd.xlane.f32.xlu0 %v557
    %v559 = vpop.xlane.xlu0 %558
    %v560 = vmul.f32 %v556, %v132
    %v561 = vmul.f32 %v559, %v132
    %v562 = vsub.f32 %v548, %v560
    %v563 = vsub.f32 %v549, %v561
    %v564 = vmul.f32 %v562, %v562
    %v565 = vmul.f32 %v563, %v563
    %v566 = vsel %vm119, %v564, 0.0
    %567 = vadd.xlane.f32.xlu0 %v566
    %v568 = vpop.xlane.xlu0 %567
    %v569 = vsel %vm119, %v565, 0.0
    %570 = vadd.xlane.f32.xlu0 %v569
    %v571 = vpop.xlane.xlu0 %570
    %v572 = vmul.f32 %v568, %v132
    %v573 = vmul.f32 %v571, %v132
    %v574 = vadd.f32 %v572, 1e-12
    %v575 = vadd.f32 %v573, 1e-12
    %v576 = vrsqrt.pop %v574
    %v577 = vmul.f32 %v576, %v574
    %v578 = vmul.f32 %v577, %v576
    %v579 = vmul.f32 0.5, %v578
    %v580 = vsub.f32 1.5, %v579
    %v581 = vmul.f32 %v576, %v580
    %vm582 = vweird.f32 %v574
    %vm583 = vweird.f32 %v576
    %vm584 = vmor %vm582, %vm583
    %v585 = vsel %vm584, %v576, %v581
    %v586 = vrsqrt.pop %v575
    %v587 = vmul.f32 %v586, %v575
    %v588 = vmul.f32 %v587, %v586
    %v589 = vmul.f32 0.5, %v588
    %v590 = vsub.f32 1.5, %v589
    %v591 = vmul.f32 %v586, %v590
    %vm592 = vweird.f32 %v575
    %vm593 = vweird.f32 %v586
    %vm594 = vmor %vm592, %vm593
    %v595 = vsel %vm594, %v586, %v591
    %v596 = vmul.f32 %v562, %v585
    %v597 = vmul.f32 %v563, %v595
    %v599 = vperm.slane %v551, 0
    %v601 = vmul.f32 %v596, %v599
    %v602 = vmul.f32 %v597, %v599
    %v604 = vperm.slane %v553, 0
    %v606 = vadd.f32 %v601, %v604
    %v607 = vadd.f32 %v602, %v604
    %s608 = scalar_lea.vmem %s4, 9
    %v609 = vld [vmem:[%s608] sm:$0x1]
    %v611 = vperm.slane %v609, 0
    %617 = vrot.lane.b32.xlu0 %v510, 96
    %v618 = vpop.permute.xlu0 %617
    %619 = vrot.lane.b32.xlu0 %v511, 96
    %v620 = vpop.permute.xlu0 %619
    %621 = vrot.lane.b32.xlu0 %v512, 96
    %v622 = vpop.permute.xlu0 %621
    %623 = vrot.lane.b32.xlu0 %v513, 96
    %v624 = vpop.permute.xlu0 %623
    %v630 = vsel %vm119, %v606, 0
    %v633 = vsel %vm119, %v607, 0
    %635 = vmatpush.msra.mxu0 0.0
    %636 = vmatpush.msra.mxu0 0.0
    %637 = vmatpush.msra.mxu0 0.0
    %638 = vmatpush.msra.mxu0 0.0
    %639 = vmatpush.msra.mxu0 0.0
    %640 = vmatpush.msra.mxu0 0.0
    %641 = vmatpush.msra.mxu0 0.0
    %642 = vmatpush.msra.mxu0 0.0
    %643 = vmatpush.msra.mxu0 0.0
    %644 = vmatpush.msra.mxu0 0.0
    %645 = vmatpush.msra.mxu0 0.0
    %646 = vmatpush.msra.mxu0 0.0
    %647 = vmatpush.msra.mxu0 %v624
    %648 = vmatpush.msra.mxu0 %v622
    %649 = vmatpush.msra.mxu0 %v620
    %650 = vmatpush.msra.mxu0 %v618
    %651 = vmatmul.f32.gmra.mxu0 %v630
    %v652 = vpop.f32.mrf.mxu0
    %v653 = vadd.f32 %v611, %v652
    %654 = vmatmul.f32.gmra.mxu0 %v633
    %v655 = vpop.f32.mrf.mxu0
    %v656 = vadd.f32 %v611, %v655
    %657 = vdwg.mxu0
    %v658 = vmul.f32 %v653, 0.5
    %v659 = vmul.f32 %v656, 0.5
    %v660 = vmul.f32 %v653, 0.044715
    %v661 = vmul.f32 %v656, 0.044715
    %v662 = vmul.f32 %v660, %v653
    %v663 = vmul.f32 %v661, %v656
    %v664 = vmul.f32 %v662, %v653
    %v665 = vmul.f32 %v663, %v656
    %v666 = vadd.f32 %v653, %v664
    %v667 = vadd.f32 %v656, %v665
    %v668 = vmul.f32 %v666, 0.7978846
    %v669 = vmul.f32 %v667, 0.7978846
    %v670 = vtanh.pop %v668
    %v671 = vtanh.pop %v669
    %v672 = vadd.f32 %v670, 1.0
    %v673 = vadd.f32 %v671, 1.0
    %v674 = vmul.f32 %v658, %v672
    %v675 = vmul.f32 %v659, %v673
    %v676 = vld [vmem:[%s7] sm:$0xff]
    %v677 = vld [vmem:[%s7 + $0x8] sm:$0xff]
    %v678 = vld [vmem:[%s7 + $0x10] sm:$0xff]
    %v679 = vld [vmem:[%s7 + $0x18] sm:$0xff]
    %v680 = vld [vmem:[%s7 + $0x20] sm:$0xff]
    %v681 = vld [vmem:[%s7 + $0x28] sm:$0xff]
    %v682 = vld [vmem:[%s7 + $0x30] sm:$0xff]
    %v683 = vld [vmem:[%s7 + $0x38] sm:$0xff]
    %s684 = scalar_lea.vmem %s4, 10
    %v685 = vld [vmem:[%s684] sm:$0x1]
    %v687 = vperm.slane %v685, 0
    %v690 = vsel %vm55, %v674, 0
    %v693 = vsel %vm55, %v675, 0
    %695 = vmatpush.msra.mxu0 0.0
    %696 = vmatpush.msra.mxu0 0.0
    %697 = vmatpush.msra.mxu0 0.0
    %698 = vmatpush.msra.mxu0 0.0
    %699 = vmatpush.msra.mxu0 0.0
    %700 = vmatpush.msra.mxu0 0.0
    %701 = vmatpush.msra.mxu0 0.0
    %702 = vmatpush.msra.mxu0 0.0
    %703 = vmatpush.msra.mxu0 %v683
    %704 = vmatpush.msra.mxu0 %v682
    %705 = vmatpush.msra.mxu0 %v681
    %706 = vmatpush.msra.mxu0 %v680
    %707 = vmatpush.msra.mxu0 %v679
    %708 = vmatpush.msra.mxu0 %v678
    %709 = vmatpush.msra.mxu0 %v677
    %710 = vmatpush.msra.mxu0 %v676
    %711 = vmatmul.f32.gmra.mxu0 %v690
    %v712 = vpop.f32.mrf.mxu0
    %v713 = vadd.f32 %v687, %v712
    %714 = vmatmul.f32.gmra.mxu0 %v693
    %v715 = vpop.f32.mrf.mxu0
    %v716 = vadd.f32 %v687, %v715
    %717 = vdwg.mxu0
    %v718 = vadd.f32 %v713, %v606
    %v719 = vadd.f32 %v716, %v607
    %s720 = scalar_lea.vmem %s4, 11
    %v721 = vld [vmem:[%s720] sm:$0x1]
    %s722 = scalar_lea.vmem %s4, 12
    %v723 = vld [vmem:[%s722] sm:$0x1]
    %v724 = vsel %vm119, %v718, 0.0
    %725 = vadd.xlane.f32.xlu0 %v724
    %v726 = vpop.xlane.xlu0 %725
    %v727 = vsel %vm119, %v719, 0.0
    %728 = vadd.xlane.f32.xlu0 %v727
    %v729 = vpop.xlane.xlu0 %728
    %v730 = vmul.f32 %v726, %v132
    %v731 = vmul.f32 %v729, %v132
    %v732 = vsub.f32 %v718, %v730
    %v733 = vsub.f32 %v719, %v731
    %v734 = vmul.f32 %v732, %v732
    %v735 = vmul.f32 %v733, %v733
    %v736 = vsel %vm119, %v734, 0.0
    %737 = vadd.xlane.f32.xlu0 %v736
    %v738 = vpop.xlane.xlu0 %737
    %v739 = vsel %vm119, %v735, 0.0
    %740 = vadd.xlane.f32.xlu0 %v739
    %v741 = vpop.xlane.xlu0 %740
    %v742 = vmul.f32 %v738, %v132
    %v743 = vmul.f32 %v741, %v132
    %v744 = vadd.f32 %v742, 1e-12
    %v745 = vadd.f32 %v743, 1e-12
    %v746 = vrsqrt.pop %v744
    %v747 = vmul.f32 %v746, %v744
    %v748 = vmul.f32 %v747, %v746
    %v749 = vmul.f32 0.5, %v748
    %v750 = vsub.f32 1.5, %v749
    %v751 = vmul.f32 %v746, %v750
    %vm752 = vweird.f32 %v744
    %vm753 = vweird.f32 %v746
    %vm754 = vmor %vm752, %vm753
    %v755 = vsel %vm754, %v746, %v751
    %v756 = vrsqrt.pop %v745
    %v757 = vmul.f32 %v756, %v745
    %v758 = vmul.f32 %v757, %v756
    %v759 = vmul.f32 0.5, %v758
    %v760 = vsub.f32 1.5, %v759
    %v761 = vmul.f32 %v756, %v760
    %vm762 = vweird.f32 %v745
    %vm763 = vweird.f32 %v756
    %vm764 = vmor %vm762, %vm763
    %v765 = vsel %vm764, %v756, %v761
    %v766 = vmul.f32 %v732, %v755
    %v767 = vmul.f32 %v733, %v765
    %v769 = vperm.slane %v721, 0
    %v771 = vmul.f32 %v766, %v769
    %v772 = vmul.f32 %v767, %v769
    %v774 = vperm.slane %v723, 0
    %v776 = vadd.f32 %v771, %v774
    %v777 = vadd.f32 %v772, %v774
    %s778 = scalar_lea.vmem %s5, 32
    %v779 = vld [vmem:[%s778] sm:$0xff]
    %v780 = vld [vmem:[%s778 + $0x8] sm:$0xff]
    %v781 = vld [vmem:[%s778 + $0x10] sm:$0xff]
    %v782 = vld [vmem:[%s778 + $0x18] sm:$0xff]
    %s783 = scalar_lea.vmem %s4, 13
    %v784 = vld [vmem:[%s783] sm:$0x1]
    %v786 = vperm.slane %v784, 0
    %v789 = vsel %vm119, %v776, 0
    %v792 = vsel %vm119, %v777, 0
    %794 = vmatpush.msra.mxu0 0.0
    %795 = vmatpush.msra.mxu0 0.0
    %796 = vmatpush.msra.mxu0 0.0
    %797 = vmatpush.msra.mxu0 0.0
    %798 = vmatpush.msra.mxu0 0.0
    %799 = vmatpush.msra.mxu0 0.0
    %800 = vmatpush.msra.mxu0 0.0
    %801 = vmatpush.msra.mxu0 0.0
    %802 = vmatpush.msra.mxu0 0.0
    %803 = vmatpush.msra.mxu0 0.0
    %804 = vmatpush.msra.mxu0 0.0
    %805 = vmatpush.msra.mxu0 0.0
    %806 = vmatpush.msra.mxu0 %v782
    %807 = vmatpush.msra.mxu0 %v781
    %808 = vmatpush.msra.mxu0 %v780
    %809 = vmatpush.msra.mxu0 %v779
    %810 = vmatmul.f32.gmra.mxu0 %v789
    %v811 = vpop.f32.mrf.mxu0
    %v812 = vadd.f32 %v786, %v811
    %813 = vmatmul.f32.gmra.mxu0 %v792
    %v814 = vpop.f32.mrf.mxu0
    %v815 = vadd.f32 %v786, %v814
    %816 = vdwg.mxu0
    %819 = vrot.lane.b32.xlu0 %v812, 112
    %v820 = vpop.permute.xlu0 %819
    %821 = vrot.lane.b32.xlu0 %v815, 112
    %v822 = vpop.permute.xlu0 %821
    %823 = vrot.lane.b32.xlu0 %v812, 96
    %v824 = vpop.permute.xlu0 %823
    %v825 = vsel %vm248, %v812, 0
    %v827 = vsel %vm248, %v824, 0
    %829 = vmatpush.xpose.msra.mxu0 0.0
    %830 = vmatpush.xpose.msra.mxu0 0.0
    %831 = vmatpush.xpose.msra.mxu0 0.0
    %832 = vmatpush.xpose.msra.mxu0 0.0
    %833 = vmatpush.xpose.msra.mxu0 0.0
    %834 = vmatpush.xpose.msra.mxu0 0.0
    %835 = vmatpush.xpose.msra.mxu0 0.0
    %836 = vmatpush.xpose.msra.mxu0 0.0
    %837 = vmatpush.xpose.msra.mxu0 0.0
    %838 = vmatpush.xpose.msra.mxu0 0.0
    %839 = vmatpush.xpose.msra.mxu0 0.0
    %840 = vmatpush.xpose.msra.mxu0 0.0
    %841 = vmatpush.xpose.msra.mxu0 0.0
    %842 = vmatpush.xpose.msra.mxu0 0.0
    %843 = vmatpush.xpose.msra.mxu0 0.0
    %844 = vmatpush.xpose.msra.mxu0 %v827
    %845 = vmatmul.f32.gmra.mxu0 %v825
    %v846 = vpop.f32.mrf.mxu0
    %v847 = vadd.f32 %v238, %v846
    %848 = vdwg.mxu0
    %849 = vrot.lane.b32.xlu0 %v815, 96
    %v850 = vpop.permute.xlu0 %849
    %v851 = vsel %vm248, %v815, 0
    %v853 = vsel %vm248, %v850, 0
    %855 = vmatpush.xpose.msra.mxu0 0.0
    %856 = vmatpush.xpose.msra.mxu0 0.0
    %857 = vmatpush.xpose.msra.mxu0 0.0
    %858 = vmatpush.xpose.msra.mxu0 0.0
    %859 = vmatpush.xpose.msra.mxu0 0.0
    %860 = vmatpush.xpose.msra.mxu0 0.0
    %861 = vmatpush.xpose.msra.mxu0 0.0
    %862 = vmatpush.xpose.msra.mxu0 0.0
    %863 = vmatpush.xpose.msra.mxu0 0.0
    %864 = vmatpush.xpose.msra.mxu0 0.0
    %865 = vmatpush.xpose.msra.mxu0 0.0
    %866 = vmatpush.xpose.msra.mxu0 0.0
    %867 = vmatpush.xpose.msra.mxu0 0.0
    %868 = vmatpush.xpose.msra.mxu0 0.0
    %869 = vmatpush.xpose.msra.mxu0 0.0
    %870 = vmatpush.xpose.msra.mxu0 %v853
    %871 = vmatmul.f32.gmra.mxu0 %v851
    %v872 = vpop.f32.mrf.mxu0
    %v873 = vadd.f32 %v239, %v872
    %874 = vdwg.mxu0
    %875 = vrot.lane.b32.xlu0 %v820, 96
    %v876 = vpop.permute.xlu0 %875
    %v877 = vsel %vm248, %v820, 0
    %v879 = vsel %vm248, %v876, 0
    %881 = vmatpush.xpose.msra.mxu0 0.0
    %882 = vmatpush.xpose.msra.mxu0 0.0
    %883 = vmatpush.xpose.msra.mxu0 0.0
    %884 = vmatpush.xpose.msra.mxu0 0.0
    %885 = vmatpush.xpose.msra.mxu0 0.0
    %886 = vmatpush.xpose.msra.mxu0 0.0
    %887 = vmatpush.xpose.msra.mxu0 0.0
    %888 = vmatpush.xpose.msra.mxu0 0.0
    %889 = vmatpush.xpose.msra.mxu0 0.0
    %890 = vmatpush.xpose.msra.mxu0 0.0
    %891 = vmatpush.xpose.msra.mxu0 0.0
    %892 = vmatpush.xpose.msra.mxu0 0.0
    %893 = vmatpush.xpose.msra.mxu0 0.0
    %894 = vmatpush.xpose.msra.mxu0 0.0
    %895 = vmatpush.xpose.msra.mxu0 0.0
    %896 = vmatpush.xpose.msra.mxu0 %v879
    %897 = vmatmul.f32.gmra.mxu0 %v877
    %v898 = vpop.f32.mrf.mxu0
    %v899 = vadd.f32 %v240, %v898
    %900 = vdwg.mxu0
    %901 = vrot.lane.b32.xlu0 %v822, 96
    %v902 = vpop.permute.xlu0 %901
    %v903 = vsel %vm248, %v822, 0
    %v905 = vsel %vm248, %v902, 0
    %907 = vmatpush.xpose.msra.mxu0 0.0
    %908 = vmatpush.xpose.msra.mxu0 0.0
    %909 = vmatpush.xpose.msra.mxu0 0.0
    %910 = vmatpush.xpose.msra.mxu0 0.0
    %911 = vmatpush.xpose.msra.mxu0 0.0
    %912 = vmatpush.xpose.msra.mxu0 0.0
    %913 = vmatpush.xpose.msra.mxu0 0.0
    %914 = vmatpush.xpose.msra.mxu0 0.0
    %915 = vmatpush.xpose.msra.mxu0 0.0
    %916 = vmatpush.xpose.msra.mxu0 0.0
    %917 = vmatpush.xpose.msra.mxu0 0.0
    %918 = vmatpush.xpose.msra.mxu0 0.0
    %919 = vmatpush.xpose.msra.mxu0 0.0
    %920 = vmatpush.xpose.msra.mxu0 0.0
    %921 = vmatpush.xpose.msra.mxu0 0.0
    %922 = vmatpush.xpose.msra.mxu0 %v905
    %923 = vmatmul.f32.gmra.mxu0 %v903
    %v924 = vpop.f32.mrf.mxu0
    %v925 = vadd.f32 %v241, %v924
    %926 = vdwg.mxu0
    %v927 = vsel %vm351, %v847, -inf
    %928 = vmax.xlane.f32.xlu0 %v927
    %v929 = vpop.xlane.xlu0 %928
    %v930 = vsel %vm351, %v873, -inf
    %931 = vmax.xlane.f32.xlu0 %v930
    %v932 = vpop.xlane.xlu0 %931
    %v933 = vsel %vm351, %v899, -inf
    %934 = vmax.xlane.f32.xlu0 %v933
    %v935 = vpop.xlane.xlu0 %934
    %v936 = vsel %vm351, %v925, -inf
    %937 = vmax.xlane.f32.xlu0 %v936
    %v938 = vpop.xlane.xlu0 %937
    %v939 = vsub.f32 %v847, %v929
    %v940 = vsub.f32 %v873, %v932
    %v941 = vsub.f32 %v899, %v935
    %v942 = vsub.f32 %v925, %v938
    %v943 = vmul.f32 %v939, 1.442695
    %v944 = vpow.pop %v943
    %v945 = vmul.f32 %v940, 1.442695
    %v946 = vpow.pop %v945
    %v947 = vmul.f32 %v941, 1.442695
    %v948 = vpow.pop %v947
    %v949 = vmul.f32 %v942, 1.442695
    %v950 = vpow.pop %v949
    %v951 = vsel %vm351, %v944, 0.0
    %952 = vadd.xlane.f32.xlu0 %v951
    %v953 = vpop.xlane.xlu0 %952
    %v954 = vsel %vm351, %v946, 0.0
    %955 = vadd.xlane.f32.xlu0 %v954
    %v956 = vpop.xlane.xlu0 %955
    %v957 = vsel %vm351, %v948, 0.0
    %958 = vadd.xlane.f32.xlu0 %v957
    %v959 = vpop.xlane.xlu0 %958
    %v960 = vsel %vm351, %v950, 0.0
    %961 = vadd.xlane.f32.xlu0 %v960
    %v962 = vpop.xlane.xlu0 %961
    %v963 = vrcp.pop %v953
    %v964 = vrcp.pop %v956
    %v965 = vrcp.pop %v959
    %v966 = vrcp.pop %v962
    %v967 = vmul.f32 %v944, %v963
    %v968 = vmul.f32 %v946, %v964
    %v969 = vmul.f32 %v948, %v965
    %v970 = vmul.f32 %v950, %v966
    %971 = vrot.lane.b32.xlu0 %v812, 64
    %v972 = vpop.permute.xlu0 %971
    %v975 = vsel %vm351, %v967, 0
    %977 = vmatpush.msra.mxu0 0.0
    %978 = vmatpush.msra.mxu0 0.0
    %979 = vmatpush.msra.mxu0 0.0
    %980 = vmatpush.msra.mxu0 0.0
    %981 = vmatpush.msra.mxu0 0.0
    %982 = vmatpush.msra.mxu0 0.0
    %983 = vmatpush.msra.mxu0 0.0
    %984 = vmatpush.msra.mxu0 0.0
    %985 = vmatpush.msra.mxu0 0.0
    %986 = vmatpush.msra.mxu0 0.0
    %987 = vmatpush.msra.mxu0 0.0
    %988 = vmatpush.msra.mxu0 0.0
    %989 = vmatpush.msra.mxu0 0.0
    %990 = vmatpush.msra.mxu0 0.0
    %991 = vmatpush.msra.mxu0 0.0
    %992 = vmatpush.msra.mxu0 %v972
    %993 = vmatmul.f32.gmra.mxu0 %v975
    %v994 = vpop.f32.mrf.mxu0
    %v995 = vadd.f32 0.0, %v994
    %996 = vdwg.mxu0
    %997 = vrot.lane.b32.xlu0 %v815, 64
    %v998 = vpop.permute.xlu0 %997
    %v1001 = vsel %vm351, %v968, 0
    %1003 = vmatpush.msra.mxu0 0.0
    %1004 = vmatpush.msra.mxu0 0.0
    %1005 = vmatpush.msra.mxu0 0.0
    %1006 = vmatpush.msra.mxu0 0.0
    %1007 = vmatpush.msra.mxu0 0.0
    %1008 = vmatpush.msra.mxu0 0.0
    %1009 = vmatpush.msra.mxu0 0.0
    %1010 = vmatpush.msra.mxu0 0.0
    %1011 = vmatpush.msra.mxu0 0.0
    %1012 = vmatpush.msra.mxu0 0.0
    %1013 = vmatpush.msra.mxu0 0.0
    %1014 = vmatpush.msra.mxu0 0.0
    %1015 = vmatpush.msra.mxu0 0.0
    %1016 = vmatpush.msra.mxu0 0.0
    %1017 = vmatpush.msra.mxu0 0.0
    %1018 = vmatpush.msra.mxu0 %v998
    %1019 = vmatmul.f32.gmra.mxu0 %v1001
    %v1020 = vpop.f32.mrf.mxu0
    %v1021 = vadd.f32 0.0, %v1020
    %1022 = vdwg.mxu0
    %1023 = vrot.lane.b32.xlu0 %v820, 64
    %v1024 = vpop.permute.xlu0 %1023
    %v1027 = vsel %vm351, %v969, 0
    %1029 = vmatpush.msra.mxu0 0.0
    %1030 = vmatpush.msra.mxu0 0.0
    %1031 = vmatpush.msra.mxu0 0.0
    %1032 = vmatpush.msra.mxu0 0.0
    %1033 = vmatpush.msra.mxu0 0.0
    %1034 = vmatpush.msra.mxu0 0.0
    %1035 = vmatpush.msra.mxu0 0.0
    %1036 = vmatpush.msra.mxu0 0.0
    %1037 = vmatpush.msra.mxu0 0.0
    %1038 = vmatpush.msra.mxu0 0.0
    %1039 = vmatpush.msra.mxu0 0.0
    %1040 = vmatpush.msra.mxu0 0.0
    %1041 = vmatpush.msra.mxu0 0.0
    %1042 = vmatpush.msra.mxu0 0.0
    %1043 = vmatpush.msra.mxu0 0.0
    %1044 = vmatpush.msra.mxu0 %v1024
    %1045 = vmatmul.f32.gmra.mxu0 %v1027
    %v1046 = vpop.f32.mrf.mxu0
    %v1047 = vadd.f32 0.0, %v1046
    %1048 = vdwg.mxu0
    %1049 = vrot.lane.b32.xlu0 %v822, 64
    %v1050 = vpop.permute.xlu0 %1049
    %v1053 = vsel %vm351, %v970, 0
    %1055 = vmatpush.msra.mxu0 0.0
    %1056 = vmatpush.msra.mxu0 0.0
    %1057 = vmatpush.msra.mxu0 0.0
    %1058 = vmatpush.msra.mxu0 0.0
    %1059 = vmatpush.msra.mxu0 0.0
    %1060 = vmatpush.msra.mxu0 0.0
    %1061 = vmatpush.msra.mxu0 0.0
    %1062 = vmatpush.msra.mxu0 0.0
    %1063 = vmatpush.msra.mxu0 0.0
    %1064 = vmatpush.msra.mxu0 0.0
    %1065 = vmatpush.msra.mxu0 0.0
    %1066 = vmatpush.msra.mxu0 0.0
    %1067 = vmatpush.msra.mxu0 0.0
    %1068 = vmatpush.msra.mxu0 0.0
    %1069 = vmatpush.msra.mxu0 0.0
    %1070 = vmatpush.msra.mxu0 %v1050
    %1071 = vmatmul.f32.gmra.mxu0 %v1053
    %v1072 = vpop.f32.mrf.mxu0
    %v1073 = vadd.f32 0.0, %v1072
    %1074 = vdwg.mxu0
    %1077 = vrot.lane.b32.xlu0 %v1047, 16
    %v1078 = vpop.permute.xlu0 %1077
    %1079 = vrot.lane.b32.xlu0 %v1073, 16
    %v1080 = vpop.permute.xlu0 %1079
    %v1083 = vsel %vm248, %v995, %v1078
    %v1084 = vsel %vm248, %v1021, %v1080
    %s1085 = scalar_lea.vmem %s6, 32
    %v1086 = vld [vmem:[%s1085] sm:$0xff]
    %v1087 = vld [vmem:[%s1085 + $0x8] sm:$0xff]
    %v1088 = vld [vmem:[%s1085 + $0x10] sm:$0xff]
    %v1089 = vld [vmem:[%s1085 + $0x18] sm:$0xff]
    %s1090 = scalar_lea.vmem %s4, 14
    %v1091 = vld [vmem:[%s1090] sm:$0x1]
    %v1093 = vperm.slane %v1091, 0
    %v1096 = vsel %vm119, %v1083, 0
    %v1099 = vsel %vm119, %v1084, 0
    %1101 = vmatpush.msra.mxu0 0.0
    %1102 = vmatpush.msra.mxu0 0.0
    %1103 = vmatpush.msra.mxu0 0.0
    %1104 = vmatpush.msra.mxu0 0.0
    %1105 = vmatpush.msra.mxu0 0.0
    %1106 = vmatpush.msra.mxu0 0.0
    %1107 = vmatpush.msra.mxu0 0.0
    %1108 = vmatpush.msra.mxu0 0.0
    %1109 = vmatpush.msra.mxu0 0.0
    %1110 = vmatpush.msra.mxu0 0.0
    %1111 = vmatpush.msra.mxu0 0.0
    %1112 = vmatpush.msra.mxu0 0.0
    %1113 = vmatpush.msra.mxu0 %v1089
    %1114 = vmatpush.msra.mxu0 %v1088
    %1115 = vmatpush.msra.mxu0 %v1087
    %1116 = vmatpush.msra.mxu0 %v1086
    %1117 = vmatmul.f32.gmra.mxu0 %v1096
    %v1118 = vpop.f32.mrf.mxu0
    %v1119 = vadd.f32 %v1093, %v1118
    %1120 = vmatmul.f32.gmra.mxu0 %v1099
    %v1121 = vpop.f32.mrf.mxu0
    %v1122 = vadd.f32 %v1093, %v1121
    %1123 = vdwg.mxu0
    %v1124 = vadd.f32 %v1119, %v776
    %v1125 = vadd.f32 %v1122, %v777
    %s1126 = scalar_lea.vmem %s4, 15
    %v1127 = vld [vmem:[%s1126] sm:$0x1]
    %s1128 = scalar_lea.vmem %s4, 16
    %v1129 = vld [vmem:[%s1128] sm:$0x1]
    %v1130 = vsel %vm119, %v1124, 0.0
    %1131 = vadd.xlane.f32.xlu0 %v1130
    %v1132 = vpop.xlane.xlu0 %1131
    %v1133 = vsel %vm119, %v1125, 0.0
    %1134 = vadd.xlane.f32.xlu0 %v1133
    %v1135 = vpop.xlane.xlu0 %1134
    %v1136 = vmul.f32 %v1132, %v132
    %v1137 = vmul.f32 %v1135, %v132
    %v1138 = vsub.f32 %v1124, %v1136
    %v1139 = vsub.f32 %v1125, %v1137
    %v1140 = vmul.f32 %v1138, %v1138
    %v1141 = vmul.f32 %v1139, %v1139
    %v1142 = vsel %vm119, %v1140, 0.0
    %1143 = vadd.xlane.f32.xlu0 %v1142
    %v1144 = vpop.xlane.xlu0 %1143
    %v1145 = vsel %vm119, %v1141, 0.0
    %1146 = vadd.xlane.f32.xlu0 %v1145
    %v1147 = vpop.xlane.xlu0 %1146
    %v1148 = vmul.f32 %v1144, %v132
    %v1149 = vmul.f32 %v1147, %v132
    %v1150 = vadd.f32 %v1148, 1e-12
    %v1151 = vadd.f32 %v1149, 1e-12
    %v1152 = vrsqrt.pop %v1150
    %v1153 = vmul.f32 %v1152, %v1150
    %v1154 = vmul.f32 %v1153, %v1152
    %v1155 = vmul.f32 0.5, %v1154
    %v1156 = vsub.f32 1.5, %v1155
    %v1157 = vmul.f32 %v1152, %v1156
    %vm1158 = vweird.f32 %v1150
    %vm1159 = vweird.f32 %v1152
    %vm1160 = vmor %vm1158, %vm1159
    %v1161 = vsel %vm1160, %v1152, %v1157
    %v1162 = vrsqrt.pop %v1151
    %v1163 = vmul.f32 %v1162, %v1151
    %v1164 = vmul.f32 %v1163, %v1162
    %v1165 = vmul.f32 0.5, %v1164
    %v1166 = vsub.f32 1.5, %v1165
    %v1167 = vmul.f32 %v1162, %v1166
    %vm1168 = vweird.f32 %v1151
    %vm1169 = vweird.f32 %v1162
    %vm1170 = vmor %vm1168, %vm1169
    %v1171 = vsel %vm1170, %v1162, %v1167
    %v1172 = vmul.f32 %v1138, %v1161
    %v1173 = vmul.f32 %v1139, %v1171
    %v1175 = vperm.slane %v1127, 0
    %v1177 = vmul.f32 %v1172, %v1175
    %v1178 = vmul.f32 %v1173, %v1175
    %v1180 = vperm.slane %v1129, 0
    %v1182 = vadd.f32 %v1177, %v1180
    %v1183 = vadd.f32 %v1178, %v1180
    %s1184 = scalar_lea.vmem %s4, 17
    %v1185 = vld [vmem:[%s1184] sm:$0x1]
    %v1187 = vperm.slane %v1185, 0
    %1193 = vrot.lane.b32.xlu0 %v1086, 96
    %v1194 = vpop.permute.xlu0 %1193
    %1195 = vrot.lane.b32.xlu0 %v1087, 96
    %v1196 = vpop.permute.xlu0 %1195
    %1197 = vrot.lane.b32.xlu0 %v1088, 96
    %v1198 = vpop.permute.xlu0 %1197
    %1199 = vrot.lane.b32.xlu0 %v1089, 96
    %v1200 = vpop.permute.xlu0 %1199
    %v1206 = vsel %vm119, %v1182, 0
    %v1209 = vsel %vm119, %v1183, 0
    %1211 = vmatpush.msra.mxu0 0.0
    %1212 = vmatpush.msra.mxu0 0.0
    %1213 = vmatpush.msra.mxu0 0.0
    %1214 = vmatpush.msra.mxu0 0.0
    %1215 = vmatpush.msra.mxu0 0.0
    %1216 = vmatpush.msra.mxu0 0.0
    %1217 = vmatpush.msra.mxu0 0.0
    %1218 = vmatpush.msra.mxu0 0.0
    %1219 = vmatpush.msra.mxu0 0.0
    %1220 = vmatpush.msra.mxu0 0.0
    %1221 = vmatpush.msra.mxu0 0.0
    %1222 = vmatpush.msra.mxu0 0.0
    %1223 = vmatpush.msra.mxu0 %v1200
    %1224 = vmatpush.msra.mxu0 %v1198
    %1225 = vmatpush.msra.mxu0 %v1196
    %1226 = vmatpush.msra.mxu0 %v1194
    %1227 = vmatmul.f32.gmra.mxu0 %v1206
    %v1228 = vpop.f32.mrf.mxu0
    %v1229 = vadd.f32 %v1187, %v1228
    %1230 = vmatmul.f32.gmra.mxu0 %v1209
    %v1231 = vpop.f32.mrf.mxu0
    %v1232 = vadd.f32 %v1187, %v1231
    %1233 = vdwg.mxu0
    %v1234 = vmul.f32 %v1229, 0.5
    %v1235 = vmul.f32 %v1232, 0.5
    %v1236 = vmul.f32 %v1229, 0.044715
    %v1237 = vmul.f32 %v1232, 0.044715
    %v1238 = vmul.f32 %v1236, %v1229
    %v1239 = vmul.f32 %v1237, %v1232
    %v1240 = vmul.f32 %v1238, %v1229
    %v1241 = vmul.f32 %v1239, %v1232
    %v1242 = vadd.f32 %v1229, %v1240
    %v1243 = vadd.f32 %v1232, %v1241
    %v1244 = vmul.f32 %v1242, 0.7978846
    %v1245 = vmul.f32 %v1243, 0.7978846
    %v1246 = vtanh.pop %v1244
    %v1247 = vtanh.pop %v1245
    %v1248 = vadd.f32 %v1246, 1.0
    %v1249 = vadd.f32 %v1247, 1.0
    %v1250 = vmul.f32 %v1234, %v1248
    %v1251 = vmul.f32 %v1235, %v1249
    %s1252 = scalar_lea.vmem %s7, 64
    %v1253 = vld [vmem:[%s1252] sm:$0xff]
    %v1254 = vld [vmem:[%s1252 + $0x8] sm:$0xff]
    %v1255 = vld [vmem:[%s1252 + $0x10] sm:$0xff]
    %v1256 = vld [vmem:[%s1252 + $0x18] sm:$0xff]
    %v1257 = vld [vmem:[%s1252 + $0x20] sm:$0xff]
    %v1258 = vld [vmem:[%s1252 + $0x28] sm:$0xff]
    %v1259 = vld [vmem:[%s1252 + $0x30] sm:$0xff]
    %v1260 = vld [vmem:[%s1252 + $0x38] sm:$0xff]
    %s1261 = scalar_lea.vmem %s4, 18
    %v1262 = vld [vmem:[%s1261] sm:$0x1]
    %v1264 = vperm.slane %v1262, 0
    %v1267 = vsel %vm55, %v1250, 0
    %v1270 = vsel %vm55, %v1251, 0
    %1272 = vmatpush.msra.mxu0 0.0
    %1273 = vmatpush.msra.mxu0 0.0
    %1274 = vmatpush.msra.mxu0 0.0
    %1275 = vmatpush.msra.mxu0 0.0
    %1276 = vmatpush.msra.mxu0 0.0
    %1277 = vmatpush.msra.mxu0 0.0
    %1278 = vmatpush.msra.mxu0 0.0
    %1279 = vmatpush.msra.mxu0 0.0
    %1280 = vmatpush.msra.mxu0 %v1260
    %1281 = vmatpush.msra.mxu0 %v1259
    %1282 = vmatpush.msra.mxu0 %v1258
    %1283 = vmatpush.msra.mxu0 %v1257
    %1284 = vmatpush.msra.mxu0 %v1256
    %1285 = vmatpush.msra.mxu0 %v1255
    %1286 = vmatpush.msra.mxu0 %v1254
    %1287 = vmatpush.msra.mxu0 %v1253
    %1288 = vmatmul.f32.gmra.mxu0 %v1267
    %v1289 = vpop.f32.mrf.mxu0
    %v1290 = vadd.f32 %v1264, %v1289
    %1291 = vmatmul.f32.gmra.mxu0 %v1270
    %v1292 = vpop.f32.mrf.mxu0
    %v1293 = vadd.f32 %v1264, %v1292
    %1294 = vdwg.mxu0
    %v1295 = vadd.f32 %v1290, %v1182
    %v1296 = vadd.f32 %v1293, %v1183
    %s1297 = scalar_lea.vmem %s4, 19
    %v1298 = vld [vmem:[%s1297] sm:$0x1]
    %s1299 = scalar_lea.vmem %s4, 20
    %v1300 = vld [vmem:[%s1299] sm:$0x1]
    %v1301 = vsel %vm119, %v1295, 0.0
    %1302 = vadd.xlane.f32.xlu0 %v1301
    %v1303 = vpop.xlane.xlu0 %1302
    %v1304 = vsel %vm119, %v1296, 0.0
    %1305 = vadd.xlane.f32.xlu0 %v1304
    %v1306 = vpop.xlane.xlu0 %1305
    %v1307 = vmul.f32 %v1303, %v132
    %v1308 = vmul.f32 %v1306, %v132
    %v1309 = vsub.f32 %v1295, %v1307
    %v1310 = vsub.f32 %v1296, %v1308
    %v1311 = vmul.f32 %v1309, %v1309
    %v1312 = vmul.f32 %v1310, %v1310
    %v1313 = vsel %vm119, %v1311, 0.0
    %1314 = vadd.xlane.f32.xlu0 %v1313
    %v1315 = vpop.xlane.xlu0 %1314
    %v1316 = vsel %vm119, %v1312, 0.0
    %1317 = vadd.xlane.f32.xlu0 %v1316
    %v1318 = vpop.xlane.xlu0 %1317
    %v1319 = vmul.f32 %v1315, %v132
    %v1320 = vmul.f32 %v1318, %v132
    %v1321 = vadd.f32 %v1319, 1e-12
    %v1322 = vadd.f32 %v1320, 1e-12
    %v1323 = vrsqrt.pop %v1321
    %v1324 = vmul.f32 %v1323, %v1321
    %v1325 = vmul.f32 %v1324, %v1323
    %v1326 = vmul.f32 0.5, %v1325
    %v1327 = vsub.f32 1.5, %v1326
    %v1328 = vmul.f32 %v1323, %v1327
    %vm1329 = vweird.f32 %v1321
    %vm1330 = vweird.f32 %v1323
    %vm1331 = vmor %vm1329, %vm1330
    %v1332 = vsel %vm1331, %v1323, %v1328
    %v1333 = vrsqrt.pop %v1322
    %v1334 = vmul.f32 %v1333, %v1322
    %v1335 = vmul.f32 %v1334, %v1333
    %v1336 = vmul.f32 0.5, %v1335
    %v1337 = vsub.f32 1.5, %v1336
    %v1338 = vmul.f32 %v1333, %v1337
    %vm1339 = vweird.f32 %v1322
    %vm1340 = vweird.f32 %v1333
    %vm1341 = vmor %vm1339, %vm1340
    %v1342 = vsel %vm1341, %v1333, %v1338
    %v1343 = vmul.f32 %v1309, %v1332
    %v1344 = vmul.f32 %v1310, %v1342
    %v1346 = vperm.slane %v1298, 0
    %v1348 = vmul.f32 %v1343, %v1346
    %v1349 = vmul.f32 %v1344, %v1346
    %v1351 = vperm.slane %v1300, 0
    %v1353 = vadd.f32 %v1348, %v1351
    %v1354 = vadd.f32 %v1349, %v1351
    %v1355 = vld [vmem:[%s3 + $0x50] sm:$0xff]
    %v1356 = vld [vmem:[%s3 + $0x58] sm:$0xff]
    %v1357 = vld [vmem:[%s3 + $0x60] sm:$0xff]
    %v1358 = vld [vmem:[%s3 + $0x68] sm:$0xff]
    %s1359 = scalar_lea.vmem %s4, 4
    %v1360 = vld [vmem:[%s1359] sm:$0x1]
    %v1362 = vrot.slane %v1354, 7
    %vm1364 = vcmask 1040384
    %v1365 = vsel %vm1364, %v1353, %v1362
    %v1367 = vperm.slane %v1360, 0
    %v1370 = vsel %vm119, %v1365, 0
    %1372 = vmatpush.msra.mxu0 0.0
    %1373 = vmatpush.msra.mxu0 0.0
    %1374 = vmatpush.msra.mxu0 0.0
    %1375 = vmatpush.msra.mxu0 0.0
    %1376 = vmatpush.msra.mxu0 0.0
    %1377 = vmatpush.msra.mxu0 0.0
    %1378 = vmatpush.msra.mxu0 0.0
    %1379 = vmatpush.msra.mxu0 0.0
    %1380 = vmatpush.msra.mxu0 0.0
    %1381 = vmatpush.msra.mxu0 0.0
    %1382 = vmatpush.msra.mxu0 0.0
    %1383 = vmatpush.msra.mxu0 0.0
    %1384 = vmatpush.msra.mxu0 %v1358
    %1385 = vmatpush.msra.mxu0 %v1357
    %1386 = vmatpush.msra.mxu0 %v1356
    %1387 = vmatpush.msra.mxu0 %v1355
    %1388 = vmatmul.f32.gmra.mxu0 %v1370
    %v1389 = vpop.f32.mrf.mxu0
    %v1390 = vadd.f32 %v1367, %v1389
    %1391 = vdwg.mxu0
    %v1392 = vtanh.pop %v1390
    %vm1393 = vcmask 254976
    %1394 = vst.msk [vmem:[#allocation2] sm:$0x3] %vm1393, %v1392
    // Predicated region
    $region34: #{model_base_forward.1} parent=1 // pred_check
      _
    $region35: #{model_base_forward.1} parent=1 // pred_check_branch
      %1396 = sbr.rel (0) target = $region37
    $region36: #{model_base_forward.1} parent=1 // pred_region
      %1398 = vsyncadd [#allocation3], 0
      %s1400 = sshll.u32 [#allocation2], 4
      %s1401 = int_to_ptr.vmem [resolvable:$true] %s1400
      %s1402 = sshll.u32 %s8, 4
      %s1403 = int_to_ptr.hbm [resolvable:$true] %s1402
      %1405 = dma.vmem_to_hbm [thread:$0]  %s1401, 32, %s1403, [#allocation3]
    $region37: #{model_base_forward.1} parent=1 // pred_fallthru
      _
    // Predicated region
    $region38: #{model_base_forward.1} parent=1 // pred_check
      _
    $region39: #{model_base_forward.1} parent=1 // pred_check_branch
      %1407 = sbr.rel (0) target = $region41
    $region40: #{model_base_forward.1} parent=1 // pred_region
      %1409 = dma.done [#allocation3], 32
    $region41: #{model_base_forward.1} parent=1 // pred_fallthru
      _
    %1410 = vsyncpa [#allocation3], 1

</llo_original>
